<compile_context>
chip_gen: v5e
topology: v5e:2x2
jax: 0.10.0
libtpu: 0.0.40
codegen_flags: <defaults>
</compile_context>

<pallas_src>
import functools

import jax
import jax.numpy as jnp
from jax import lax
from jax.experimental import pallas as pl
from jax.experimental.pallas import tpu as pltpu

_SQRT2_INV = 0.7071067811865476
_NEG_BIG = -1e30


def _gelu_exact(x):
    # PyTorch nn.GELU() default (approximate='none'): 0.5*x*(1+erf(x/sqrt(2)))
    return 0.5 * x * (1.0 + lax.erf(x * _SQRT2_INV))


def _layernorm(x, gamma, beta, eps=1e-5):
    mu = jnp.mean(x, axis=-1, keepdims=True)
    var = jnp.mean((x - mu) ** 2, axis=-1, keepdims=True)
    return (x - mu) * lax.rsqrt(var + eps) * gamma + beta


def _block_kernel(x_ref,
                  g1_ref, b1_ref,
                  wq_ref, bq_ref, wk_ref, bk_ref, wv_ref, bv_ref,
                  wproj_ref, bproj_ref,
                  g2_ref, b2_ref,
                  w1_ref, bb1_ref, w2_ref, bb2_ref,
                  o_ref,
                  hf_sc, k_sc, v_sc,
                  *, num_heads, head_dim, q_tile, n_valid):
    qi = pl.program_id(1)
    n_pad = hf_sc.shape[0]
    cdt = jnp.bfloat16

    # ---- once per batch element: LN1(x), K^T and head-major V -> VMEM scratch ----
    @pl.when(qi == 0)
    def _():
        xf = x_ref[0]                                                  # (Np, C) f32
        hf = _layernorm(xf, g1_ref[0], b1_ref[0]).astype(cdt)          # (Np, C) bf16
        hf_sc[...] = hf
        kf = (jnp.dot(hf, wk_ref[...], preferred_element_type=jnp.float32)
              + bk_ref[0])                                             # (Np, C) f32
        vf = (jnp.dot(hf, wv_ref[...], preferred_element_type=jnp.float32)
              + bv_ref[0])                                             # (Np, C) f32
        # K stored transposed (C, Np): lane-dense along the sequence, native MXU
        # orientation for the scores matmul, no per-tile relayout.
        k_sc[...] = kf.T.astype(cdt)
        # V stored head-major (heads, Np, hd); head split done once per batch element.
        for h in range(num_heads):
            v_sc[h] = vf[:, h * head_dim:(h + 1) * head_dim].astype(cdt)

    # ---- this query tile ----
    q_start = pl.multiple_of(qi * q_tile, q_tile)
    x_t = x_ref[0, pl.ds(q_start, q_tile), :]                          # (tq, C) f32 (residual)
    h1 = hf_sc[pl.ds(q_start, q_tile), :]                              # (tq, C) bf16 (cached LN1)

    # attention scale already folded into wq / bq (host-side)
    q_all = (jnp.dot(h1, wq_ref[...], preferred_element_type=jnp.float32)
             + bq_ref[0]).astype(cdt)                                  # (tq, C)

    need_mask = n_pad != n_valid
    if need_mask:
        col = lax.broadcasted_iota(jnp.int32, (q_tile, n_pad), 1)
        key_mask = col < n_valid

    o_heads = []
    for h in range(num_heads):
        sl = slice(h * head_dim, (h + 1) * head_dim)
        q_h = q_all[:, sl]                                             # (tq, hd) bf16
        k_h = k_sc[sl, :]                                              # (hd, Np) bf16
        s = jnp.dot(q_h, k_h, preferred_element_type=jnp.float32)      # (tq, Np) f32
        if need_mask:
            s = jnp.where(key_mask, s, _NEG_BIG)
        s = s - jnp.max(s, axis=-1, keepdims=True)
        p = jnp.exp(s)
        inv = pl.reciprocal(jnp.sum(p, axis=-1, keepdims=True), approx=True)  # (tq,1)
        o_h = jnp.dot(p.astype(cdt), v_sc[h],
                      preferred_element_type=jnp.float32)              # (tq, hd) f32
        # deferred softmax normalization (scale hd cols instead of Np cols)
        o_heads.append((o_h * inv).astype(cdt))

    attn = jnp.concatenate(o_heads, axis=-1)                           # (tq, C) bf16
    # single full-contraction output projection (replaces per-head K=hd folds)
    proj = (jnp.dot(attn, wproj_ref[...], preferred_element_type=jnp.float32)
            + bproj_ref[0])
    x1 = x_t + proj

    # ---- LayerNorm 2 + MLP + residual ----
    # TODO(synk): for ViT-H-class configs on v7x (C>=1280, hidden>=5120), chunk the MLP
    # hidden dim so w_fc1 / w_fc2 need not be fully VMEM-resident simultaneously.
    # TODO(synk): for v7x with B==1, move the qi==0 K/V precompute into a prologue
    # pallas_call so the q axis can be marked "parallel" across both TensorCores.
    h2 = _layernorm(x1, g2_ref[0], b2_ref[0]).astype(cdt)
    m = jnp.dot(h2, w1_ref[...], preferred_element_type=jnp.float32) + bb1_ref[0]
    m = _gelu_exact(m).astype(cdt)
    m = jnp.dot(m, w2_ref[...], preferred_element_type=jnp.float32) + bb2_ref[0]

    o_ref[0] = (x1 + m).astype(o_ref.dtype)


def _round_up(n, m):
    return ((n + m - 1) // m) * m


def _vmem_capacity_bytes():
    try:
        return int(pltpu.get_tpu_info().vmem_capacity_bytes)
    except Exception:
        return 64 * 1024 * 1024        # conservative (v7x per-TensorCore)


def _pick_q_tile(n_pad, large_vmem):
    if n_pad <= 256:
        return n_pad
    cands = (512, 256, 128) if large_vmem else (256, 128)
    for t in cands:
        if n_pad % t == 0:
            return t
    return n_pad


def vit_block(x, params, *, num_heads, q_tile=None):
    """x: (B, N, C) float32. params: dict of pre-transposed weights / (1, dim) vectors."""
    B, N, C = x.shape
    head_dim = C // num_heads
    scale = head_dim ** -0.5
    hidden = params["w_fc1"].shape[1]
    cdt = jnp.bfloat16

    vmem_cap = _vmem_capacity_bytes()
    large_vmem = vmem_cap >= 96 * 1024 * 1024     # v5e/v6e (128 MiB) vs v7x (64 MiB)

    # Pad non-aligned sequence lengths (e.g. 197, 577) to restore aligned tiles.
    n_pad = _round_up(N, 8) if N <= 256 else _round_up(N, 128)
    if q_tile is None:
        q_tile = _pick_q_tile(n_pad, large_vmem)
    assert n_pad % q_tile == 0 and (q_tile == n_pad or q_tile % 8 == 0), "bad q_tile"
    n_q = n_pad // q_tile

    x_in = x if n_pad == N else jnp.pad(x, ((0, 0), (0, n_pad - N), (0, 0)))

    w_qkv = params["w_qkv"].astype(jnp.float32)
    b_qkv = params["b_qkv"].astype(jnp.float32)

    # Split QKV; fold the attention scale into the Q projection; bf16 weights for the MXU.
    w_q = (w_qkv[:, :C] * scale).astype(cdt)
    b_q = b_qkv[:, :C] * scale
    w_k = w_qkv[:, C:2 * C].astype(cdt)
    b_k = b_qkv[:, C:2 * C]
    w_v = w_qkv[:, 2 * C:].astype(cdt)
    b_v = b_qkv[:, 2 * C:]

    param_list = [
        params["ln1_g"].astype(jnp.float32), params["ln1_b"].astype(jnp.float32),
        w_q, b_q, w_k, b_k, w_v, b_v,
        params["w_proj"].astype(cdt), params["b_proj"].astype(jnp.float32),
        params["ln2_g"].astype(jnp.float32), params["ln2_b"].astype(jnp.float32),
        params["w_fc1"].astype(cdt), params["b_fc1"].astype(jnp.float32),
        params["w_fc2"].astype(cdt), params["b_fc2"].astype(jnp.float32),
    ]

    kernel = functools.partial(_block_kernel, num_heads=num_heads,
                               head_dim=head_dim, q_tile=q_tile, n_valid=N)

    # Weights / biases: whole-array resident in VMEM, single-buffered (no pipelining).
    weight_spec = pl.BlockSpec(memory_space=pltpu.MemorySpace.VMEM)

    # ---- VMEM budget, clamped to device capacity (v7x-safe) ----
    def _lane_pad(n): return max(_round_up(n, 128), 128)
    def _sub_pad(n): return max(_round_up(n, 8), 8)

    weight_bytes = sum(int(p.size) * p.dtype.itemsize for p in param_list)
    pipe_bytes = 2 * n_pad * C * 4 + 2 * q_tile * C * 4           # x block + out block (x2 bufs)
    scratch_bytes = 2 * (_sub_pad(n_pad) * _lane_pad(C)           # hf_sc (bf16)
                         + _sub_pad(C) * _lane_pad(n_pad)         # k_sc  (bf16)
                         + num_heads * _sub_pad(n_pad) * _lane_pad(head_dim))  # v_sc
    live_bytes = (6 * q_tile * max(hidden, 2 * C) + 2 * q_tile * n_pad) * 4
    need = int(1.5 * (weight_bytes + pipe_bytes + scratch_bytes + live_bytes))
    vmem_limit = int(min(max(32 * 1024 * 1024, need), vmem_cap - 8 * 1024 * 1024))

    flops = int(2 * B * n_pad * C * (4 * C)                       # q/k/v + out-proj
                + 4 * B * num_heads * n_pad * n_pad * head_dim    # scores + attn @ v
                + 4 * B * n_pad * C * hidden)                     # fc1 + fc2
    transcendentals = int(B * num_heads * n_pad * n_pad + B * n_pad * hidden)
    # weights + x read + output write
    bytes_accessed = int(weight_bytes + 2 * B * n_pad * C * 4)

    out = pl.pallas_call(
        kernel,
        out_shape=jax.ShapeDtypeStruct((B, n_pad, C), x.dtype),
        grid_spec=pltpu.PrefetchScalarGridSpec(
            num_scalar_prefetch=0,
            grid=(B, n_q),
            in_specs=[pl.BlockSpec((1, n_pad, C), lambda b, q: (b, 0, 0))]
                     + [weight_spec] * len(param_list),
            out_specs=pl.BlockSpec((1, q_tile, C), lambda b, q: (b, q, 0)),
            scratch_shapes=[pltpu.VMEM((n_pad, C), cdt),                       # LN1 cache
                            pltpu.VMEM((C, n_pad), cdt),                       # K^T
                            pltpu.VMEM((num_heads, n_pad, head_dim), cdt)],    # V
        ),
        compiler_params=pltpu.CompilerParams(
            dimension_semantics=("parallel", "arbitrary"),
            vmem_limit_bytes=vmem_limit),
        cost_estimate=pl.CostEstimate(flops=flops,
                                      transcendentals=transcendentals,
                                      bytes_accessed=bytes_accessed),
    )(x_in, *param_list)

    return out if n_pad == N else out[:, :N, :]


def _reference(x, params, *, num_heads):
    """Pure-JAX f32 reference mirroring the PyTorch Block (dropout=0 / eval)."""
    B, N, C = x.shape
    hd = C // num_heads
    scale = hd ** -0.5

    def ln(z, g, b):
        mu = jnp.mean(z, -1, keepdims=True)
        var = jnp.mean((z - mu) ** 2, -1, keepdims=True)
        return (z - mu) / jnp.sqrt(var + 1e-5) * g[0] + b[0]

    h = ln(x, params["ln1_g"], params["ln1_b"])
    qkv = h @ params["w_qkv"] + params["b_qkv"][0]
    qkv = qkv.reshape(B, N, 3, num_heads, hd).transpose(2, 0, 3, 1, 4)
    q, k, v = qkv[0], qkv[1], qkv[2]
    attn = jnp.einsum("bhnd,bhmd->bhnm", q, k) * scale
    attn = jax.nn.softmax(attn, -1)
    ao = jnp.einsum("bhnm,bhmd->bhnd", attn, v).transpose(0, 2, 1, 3).reshape(B, N, C)
    x = x + ao @ params["w_proj"] + params["b_proj"][0]

    h2 = ln(x, params["ln2_g"], params["ln2_b"])
    h2 = h2 @ params["w_fc1"] + params["b_fc1"][0]
    h2 = 0.5 * h2 * (1.0 + lax.erf(h2 / jnp.sqrt(2.0)))
    h2 = h2 @ params["w_fc2"] + params["b_fc2"][0]
    return x + h2


if __name__ == "__main__":
    def _make_params(key, C, hidden):
        ks = jax.random.split(key, 10)
        return {
            "ln1_g": 1.0 + 0.05 * jax.random.normal(ks[6], (1, C), jnp.float32),
            "ln1_b": 0.02 * jax.random.normal(ks[7], (1, C), jnp.float32),
            "ln2_g": 1.0 + 0.05 * jax.random.normal(ks[8], (1, C), jnp.float32),
            "ln2_b": 0.02 * jax.random.normal(ks[9], (1, C), jnp.float32),
            # Linear weights stored pre-transposed as (in_dim, out_dim)
            "w_qkv": 0.02 * jax.random.normal(ks[1], (C, 3 * C), jnp.float32),
            "b_qkv": 0.01 * jax.random.normal(ks[2], (1, 3 * C), jnp.float32),
            "w_proj": 0.02 * jax.random.normal(ks[3], (C, C), jnp.float32),
            "b_proj": jnp.zeros((1, C), jnp.float32),
            "w_fc1": 0.02 * jax.random.normal(ks[4], (C, hidden), jnp.float32),
            "b_fc1": 0.01 * jax.random.normal(ks[5], (1, hidden), jnp.float32),
            "w_fc2": 0.02 * jax.random.normal(ks[5], (hidden, C), jnp.float32),
            "b_fc2": jnp.zeros((1, C), jnp.float32),
        }

    key = jax.random.PRNGKey(0)
    k_x1, k_p1, k_x2, k_p2 = jax.random.split(key, 4)

    # Case 1: aligned N, two query tiles per batch element (exercises K/V + LN1 scratch reuse).
    B, N, C, H = 2, 32, 64, 4
    hidden = int(C * 4.0)
    params = _make_params(k_p1, C, hidden)
    x = jax.random.normal(k_x1, (B, N, C), jnp.float32)
    out = jax.block_until_ready(vit_block(x, params, num_heads=H, q_tile=16))
    ref = _reference(x, params, num_heads=H)
    assert out.shape == (B, N, C)
    err = float(jnp.max(jnp.abs(out - ref)))
    # bf16 MXU operands + approx reciprocal => looser tolerance than pure-f32
    assert jnp.allclose(out, ref, atol=2e-2, rtol=2e-2), f"case1 mismatch (max abs err {err})"

    # Case 2: non-aligned N -> host-side padding + key-masking path.
    B2, N2 = 2, 20
    params2 = _make_params(k_p2, C, hidden)
    x2 = jax.random.normal(k_x2, (B2, N2, C), jnp.float32)
    out2 = jax.block_until_ready(vit_block(x2, params2, num_heads=H))
    ref2 = _reference(x2, params2, num_heads=H)
    assert out2.shape == (B2, N2, C)
    err2 = float(jnp.max(jnp.abs(out2 - ref2)))
    assert jnp.allclose(out2, ref2, atol=2e-2, rtol=2e-2), f"case2 mismatch (max abs err {err2})"

    print("KERNEL_OK")
</pallas_src>

<mosaic_0001>
module attributes {stable_mosaic.version = 11 : i64} {
  func.func @_block_kernel(%arg0: i32, %arg1: i32, %arg2: memref<1x32x64xf32, #tpu.memory_space<vmem>>, %arg3: memref<1x64xf32, #tpu.memory_space<vmem>>, %arg4: memref<1x64xf32, #tpu.memory_space<vmem>>, %arg5: memref<64x64xbf16, #tpu.memory_space<vmem>>, %arg6: memref<1x64xf32, #tpu.memory_space<vmem>>, %arg7: memref<64x64xbf16, #tpu.memory_space<vmem>>, %arg8: memref<1x64xf32, #tpu.memory_space<vmem>>, %arg9: memref<64x64xbf16, #tpu.memory_space<vmem>>, %arg10: memref<1x64xf32, #tpu.memory_space<vmem>>, %arg11: memref<64x64xbf16, #tpu.memory_space<vmem>>, %arg12: memref<1x64xf32, #tpu.memory_space<vmem>>, %arg13: memref<1x64xf32, #tpu.memory_space<vmem>>, %arg14: memref<1x64xf32, #tpu.memory_space<vmem>>, %arg15: memref<64x256xbf16, #tpu.memory_space<vmem>>, %arg16: memref<1x256xf32, #tpu.memory_space<vmem>>, %arg17: memref<256x64xbf16, #tpu.memory_space<vmem>>, %arg18: memref<1x64xf32, #tpu.memory_space<vmem>>, %arg19: memref<1x16x64xf32, #tpu.memory_space<vmem>>, %arg20: memref<32x64xbf16, #tpu.memory_space<vmem>>, %arg21: memref<64x32xbf16, #tpu.memory_space<vmem>>, %arg22: memref<4x32x16xbf16, #tpu.memory_space<vmem>>) attributes {dimension_semantics = [#tpu.dimension_semantics<parallel>, #tpu.dimension_semantics<arbitrary>], iteration_bounds = array<i64: 2, 2>, scalar_prefetch = 0 : i64, scratch_operands = 3 : i64, tpu.core_type = #tpu.core_type<tc>, window_params = [{transform_indices = @transform_0, window_bounds = array<i64: 1, 32, 64>}, {pipeline_mode = #tpu.pipeline_mode<synchronous>, transform_indices = @transform_1, window_bounds = array<i64: 1, 64>}, {pipeline_mode = #tpu.pipeline_mode<synchronous>, transform_indices = @transform_2, window_bounds = array<i64: 1, 64>}, {pipeline_mode = #tpu.pipeline_mode<synchronous>, transform_indices = @transform_3, window_bounds = array<i64: 64, 64>}, {pipeline_mode = #tpu.pipeline_mode<synchronous>, transform_indices = @transform_4, window_bounds = array<i64: 1, 64>}, {pipeline_mode = #tpu.pipeline_mode<synchronous>, transform_indices = @transform_5, window_bounds = array<i64: 64, 64>}, {pipeline_mode = #tpu.pipeline_mode<synchronous>, transform_indices = @transform_6, window_bounds = array<i64: 1, 64>}, {pipeline_mode = #tpu.pipeline_mode<synchronous>, transform_indices = @transform_7, window_bounds = array<i64: 64, 64>}, {pipeline_mode = #tpu.pipeline_mode<synchronous>, transform_indices = @transform_8, window_bounds = array<i64: 1, 64>}, {pipeline_mode = #tpu.pipeline_mode<synchronous>, transform_indices = @transform_9, window_bounds = array<i64: 64, 64>}, {pipeline_mode = #tpu.pipeline_mode<synchronous>, transform_indices = @transform_10, window_bounds = array<i64: 1, 64>}, {pipeline_mode = #tpu.pipeline_mode<synchronous>, transform_indices = @transform_11, window_bounds = array<i64: 1, 64>}, {pipeline_mode = #tpu.pipeline_mode<synchronous>, transform_indices = @transform_12, window_bounds = array<i64: 1, 64>}, {pipeline_mode = #tpu.pipeline_mode<synchronous>, transform_indices = @transform_13, window_bounds = array<i64: 64, 256>}, {pipeline_mode = #tpu.pipeline_mode<synchronous>, transform_indices = @transform_14, window_bounds = array<i64: 1, 256>}, {pipeline_mode = #tpu.pipeline_mode<synchronous>, transform_indices = @transform_15, window_bounds = array<i64: 256, 64>}, {pipeline_mode = #tpu.pipeline_mode<synchronous>, transform_indices = @transform_16, window_bounds = array<i64: 1, 64>}, {transform_indices = @transform_17, window_bounds = array<i64: 1, 16, 64>}]} {
    %c0_i32 = arith.constant 0 : i32
    %0 = arith.cmpi eq, %arg1, %c0_i32 : i32
    %1 = arith.extui %0 : i1 to i32
    %c0_i32_0 = arith.constant 0 : i32
    %2 = arith.cmpi ne, %1, %c0_i32_0 : i32
    scf.if %2 {
      %c0_67 = arith.constant 0 : index
      %c0_68 = arith.constant 0 : index
      %c0_69 = arith.constant 0 : index
      %155 = vector.load %arg2[%c0_67, %c0_68, %c0_69] : memref<1x32x64xf32, #tpu.memory_space<vmem>>, vector<1x32x64xf32>
      %156 = vector.shape_cast %155 : vector<1x32x64xf32> to vector<32x64xf32>
      %c0_70 = arith.constant 0 : index
      %c0_71 = arith.constant 0 : index
      %157 = vector.load %arg3[%c0_70, %c0_71] : memref<1x64xf32, #tpu.memory_space<vmem>>, vector<1x64xf32>
      %158 = vector.shape_cast %157 : vector<1x64xf32> to vector<64xf32>
      %c0_72 = arith.constant 0 : index
      %c0_73 = arith.constant 0 : index
      %159 = vector.load %arg4[%c0_72, %c0_73] : memref<1x64xf32, #tpu.memory_space<vmem>>, vector<1x64xf32>
      %160 = vector.shape_cast %159 : vector<1x64xf32> to vector<64xf32>
      %cst_74 = arith.constant dense<0.000000e+00> : vector<32xf32>
      %161 = vector.multi_reduction <add>, %156, %cst_74 [1] : vector<32x64xf32> to vector<32xf32>
      %162 = vector.shape_cast %161 : vector<32xf32> to vector<32x1xf32>
      %cst_75 = arith.constant 6.400000e+01 : f32
      %163 = vector.broadcast %cst_75 : f32 to vector<32x1xf32>
      %164 = arith.divf %162, %163 : vector<32x1xf32>
      %165 = vector.broadcast %164 : vector<32x1xf32> to vector<32x64xf32>
      %166 = arith.subf %156, %165 : vector<32x64xf32>
      %167 = arith.mulf %166, %166 : vector<32x64xf32>
      %cst_76 = arith.constant dense<0.000000e+00> : vector<32xf32>
      %168 = vector.multi_reduction <add>, %167, %cst_76 [1] : vector<32x64xf32> to vector<32xf32>
      %169 = vector.shape_cast %168 : vector<32xf32> to vector<32x1xf32>
      %cst_77 = arith.constant 6.400000e+01 : f32
      %170 = vector.broadcast %cst_77 : f32 to vector<32x1xf32>
      %171 = arith.divf %169, %170 : vector<32x1xf32>
      %172 = vector.broadcast %164 : vector<32x1xf32> to vector<32x64xf32>
      %173 = arith.subf %156, %172 : vector<32x64xf32>
      %cst_78 = arith.constant 9.99999974E-6 : f32
      %174 = vector.broadcast %cst_78 : f32 to vector<32x1xf32>
      %175 = arith.addf %171, %174 : vector<32x1xf32>
      %176 = math.rsqrt %175 : vector<32x1xf32>
      %177 = vector.broadcast %176 : vector<32x1xf32> to vector<32x64xf32>
      %178 = arith.mulf %173, %177 : vector<32x64xf32>
      %179 = vector.shape_cast %158 : vector<64xf32> to vector<1x64xf32>
      %180 = vector.broadcast %179 : vector<1x64xf32> to vector<32x64xf32>
      %181 = arith.mulf %178, %180 : vector<32x64xf32>
      %182 = vector.shape_cast %160 : vector<64xf32> to vector<1x64xf32>
      %183 = vector.broadcast %182 : vector<1x64xf32> to vector<32x64xf32>
      %184 = arith.addf %181, %183 : vector<32x64xf32>
      %185 = arith.truncf %184 : vector<32x64xf32> to vector<32x64xbf16>
      %c0_79 = arith.constant 0 : index
      %c0_80 = arith.constant 0 : index
      %186 = vector.load %arg20[%c0_79, %c0_80] : memref<32x64xbf16, #tpu.memory_space<vmem>>, vector<32x64xbf16>
      tpu.vector_store %arg20[%c0_79, %c0_80], %185 {strides = array<i32>} : memref<32x64xbf16, #tpu.memory_space<vmem>>, vector<32x64xbf16>,
      %c0_81 = arith.constant 0 : index
      %c0_82 = arith.constant 0 : index
      %187 = vector.load %arg7[%c0_81, %c0_82] : memref<64x64xbf16, #tpu.memory_space<vmem>>, vector<64x64xbf16>
      %cst_83 = arith.constant dense<0.000000e+00> : vector<32x64xf32>
      %188 = tpu.matmul %185, %187, %cst_83 {dimension_numbers = #tpu.dot_dimension_numbers<[1], [0], [0], [1], [0, 0, 1, 1], [], []>} : vector<32x64xbf16>, vector<64x64xbf16>, vector<32x64xf32> -> vector<32x64xf32>
      %c0_84 = arith.constant 0 : index
      %c0_85 = arith.constant 0 : index
      %189 = vector.load %arg8[%c0_84, %c0_85] : memref<1x64xf32, #tpu.memory_space<vmem>>, vector<1x64xf32>
      %190 = vector.shape_cast %189 : vector<1x64xf32> to vector<64xf32>
      %191 = vector.shape_cast %190 : vector<64xf32> to vector<1x64xf32>
      %192 = vector.broadcast %191 : vector<1x64xf32> to vector<32x64xf32>
      %193 = arith.addf %188, %192 : vector<32x64xf32>
      %c0_86 = arith.constant 0 : index
      %c0_87 = arith.constant 0 : index
      %194 = vector.load %arg9[%c0_86, %c0_87] : memref<64x64xbf16, #tpu.memory_space<vmem>>, vector<64x64xbf16>
      %cst_88 = arith.constant dense<0.000000e+00> : vector<32x64xf32>
      %195 = tpu.matmul %185, %194, %cst_88 {dimension_numbers = #tpu.dot_dimension_numbers<[1], [0], [0], [1], [0, 0, 1, 1], [], []>} : vector<32x64xbf16>, vector<64x64xbf16>, vector<32x64xf32> -> vector<32x64xf32>
      %c0_89 = arith.constant 0 : index
      %c0_90 = arith.constant 0 : index
      %196 = vector.load %arg10[%c0_89, %c0_90] : memref<1x64xf32, #tpu.memory_space<vmem>>, vector<1x64xf32>
      %197 = vector.shape_cast %196 : vector<1x64xf32> to vector<64xf32>
      %198 = vector.shape_cast %197 : vector<64xf32> to vector<1x64xf32>
      %199 = vector.broadcast %198 : vector<1x64xf32> to vector<32x64xf32>
      %200 = arith.addf %195, %199 : vector<32x64xf32>
      %201 = tpu.transpose %193, [1, 0] : vector<32x64xf32> -> vector<64x32xf32>
      %202 = arith.truncf %201 : vector<64x32xf32> to vector<64x32xbf16>
      %c0_91 = arith.constant 0 : index
      %c0_92 = arith.constant 0 : index
      %203 = vector.load %arg21[%c0_91, %c0_92] : memref<64x32xbf16, #tpu.memory_space<vmem>>, vector<64x32xbf16>
      tpu.vector_store %arg21[%c0_91, %c0_92], %202 {strides = array<i32>} : memref<64x32xbf16, #tpu.memory_space<vmem>>, vector<64x32xbf16>,
      %204 = vector.extract_strided_slice %200 {offsets = [0, 0], sizes = [32, 16], strides = [1, 1]} : vector<32x64xf32> to vector<32x16xf32>
      %205 = arith.truncf %204 : vector<32x16xf32> to vector<32x16xbf16>
      %c0_93 = arith.constant 0 : index
      %c0_94 = arith.constant 0 : index
      %c0_95 = arith.constant 0 : index
      %206 = vector.load %arg22[%c0_93, %c0_94, %c0_95] : memref<4x32x16xbf16, #tpu.memory_space<vmem>>, vector<1x32x16xbf16>
      %207 = vector.shape_cast %206 : vector<1x32x16xbf16> to vector<32x16xbf16>
      %208 = vector.shape_cast %205 : vector<32x16xbf16> to vector<1x32x16xbf16>
      tpu.vector_store %arg22[%c0_93, %c0_94, %c0_95], %208 {strides = array<i32>} : memref<4x32x16xbf16, #tpu.memory_space<vmem>>, vector<1x32x16xbf16>,
      %209 = vector.extract_strided_slice %200 {offsets = [0, 16], sizes = [32, 16], strides = [1, 1]} : vector<32x64xf32> to vector<32x16xf32>
      %210 = arith.truncf %209 : vector<32x16xf32> to vector<32x16xbf16>
      %c1_96 = arith.constant 1 : index
      %c0_97 = arith.constant 0 : index
      %c0_98 = arith.constant 0 : index
      %211 = vector.load %arg22[%c1_96, %c0_97, %c0_98] : memref<4x32x16xbf16, #tpu.memory_space<vmem>>, vector<1x32x16xbf16>
      %212 = vector.shape_cast %211 : vector<1x32x16xbf16> to vector<32x16xbf16>
      %213 = vector.shape_cast %210 : vector<32x16xbf16> to vector<1x32x16xbf16>
      tpu.vector_store %arg22[%c1_96, %c0_97, %c0_98], %213 {strides = array<i32>} : memref<4x32x16xbf16, #tpu.memory_space<vmem>>, vector<1x32x16xbf16>,
      %214 = vector.extract_strided_slice %200 {offsets = [0, 32], sizes = [32, 16], strides = [1, 1]} : vector<32x64xf32> to vector<32x16xf32>
      %215 = arith.truncf %214 : vector<32x16xf32> to vector<32x16xbf16>
      %c2_99 = arith.constant 2 : index
      %c0_100 = arith.constant 0 : index
      %c0_101 = arith.constant 0 : index
      %216 = vector.load %arg22[%c2_99, %c0_100, %c0_101] : memref<4x32x16xbf16, #tpu.memory_space<vmem>>, vector<1x32x16xbf16>
      %217 = vector.shape_cast %216 : vector<1x32x16xbf16> to vector<32x16xbf16>
      %218 = vector.shape_cast %215 : vector<32x16xbf16> to vector<1x32x16xbf16>
      tpu.vector_store %arg22[%c2_99, %c0_100, %c0_101], %218 {strides = array<i32>} : memref<4x32x16xbf16, #tpu.memory_space<vmem>>, vector<1x32x16xbf16>,
      %219 = vector.extract_strided_slice %200 {offsets = [0, 48], sizes = [32, 16], strides = [1, 1]} : vector<32x64xf32> to vector<32x16xf32>
      %220 = arith.truncf %219 : vector<32x16xf32> to vector<32x16xbf16>
      %c3_102 = arith.constant 3 : index
      %c0_103 = arith.constant 0 : index
      %c0_104 = arith.constant 0 : index
      %221 = vector.load %arg22[%c3_102, %c0_103, %c0_104] : memref<4x32x16xbf16, #tpu.memory_space<vmem>>, vector<1x32x16xbf16>
      %222 = vector.shape_cast %221 : vector<1x32x16xbf16> to vector<32x16xbf16>
      %223 = vector.shape_cast %220 : vector<32x16xbf16> to vector<1x32x16xbf16>
      tpu.vector_store %arg22[%c3_102, %c0_103, %c0_104], %223 {strides = array<i32>} : memref<4x32x16xbf16, #tpu.memory_space<vmem>>, vector<1x32x16xbf16>,
    } else {
    }
    %c16_i32 = arith.constant 16 : i32
    %3 = arith.muli %arg1, %c16_i32 : i32
    %4 = tpu.assume_multiple %3, 16 : i32
    %c0 = arith.constant 0 : index
    %5 = arith.index_cast %4 : i32 to index
    %c0_1 = arith.constant 0 : index
    %6 = vector.load %arg2[%c0, %5, %c0_1] : memref<1x32x64xf32, #tpu.memory_space<vmem>>, vector<1x16x64xf32>
    %7 = vector.shape_cast %6 : vector<1x16x64xf32> to vector<16x64xf32>
    %8 = arith.index_cast %4 : i32 to index
    %c0_2 = arith.constant 0 : index
    %9 = vector.load %arg20[%8, %c0_2] : memref<32x64xbf16, #tpu.memory_space<vmem>>, vector<16x64xbf16>
    %c0_3 = arith.constant 0 : index
    %c0_4 = arith.constant 0 : index
    %10 = vector.load %arg5[%c0_3, %c0_4] : memref<64x64xbf16, #tpu.memory_space<vmem>>, vector<64x64xbf16>
    %cst = arith.constant dense<0.000000e+00> : vector<16x64xf32>
    %11 = tpu.matmul %9, %10, %cst {dimension_numbers = #tpu.dot_dimension_numbers<[1], [0], [0], [1], [0, 0, 1, 1], [], []>} : vector<16x64xbf16>, vector<64x64xbf16>, vector<16x64xf32> -> vector<16x64xf32>
    %c0_5 = arith.constant 0 : index
    %c0_6 = arith.constant 0 : index
    %12 = vector.load %arg6[%c0_5, %c0_6] : memref<1x64xf32, #tpu.memory_space<vmem>>, vector<1x64xf32>
    %13 = vector.shape_cast %12 : vector<1x64xf32> to vector<64xf32>
    %14 = vector.shape_cast %13 : vector<64xf32> to vector<1x64xf32>
    %15 = vector.broadcast %14 : vector<1x64xf32> to vector<16x64xf32>
    %16 = arith.addf %11, %15 : vector<16x64xf32>
    %17 = arith.truncf %16 : vector<16x64xf32> to vector<16x64xbf16>
    %18 = vector.extract_strided_slice %17 {offsets = [0, 0], sizes = [16, 16], strides = [1, 1]} : vector<16x64xbf16> to vector<16x16xbf16>
    %c0_7 = arith.constant 0 : index
    %c0_8 = arith.constant 0 : index
    %19 = vector.load %arg21[%c0_7, %c0_8] : memref<64x32xbf16, #tpu.memory_space<vmem>>, vector<16x32xbf16>
    %cst_9 = arith.constant dense<0.000000e+00> : vector<16x32xf32>
    %20 = tpu.matmul %18, %19, %cst_9 {dimension_numbers = #tpu.dot_dimension_numbers<[1], [0], [0], [1], [0, 0, 1, 1], [], []>} : vector<16x16xbf16>, vector<16x32xbf16>, vector<16x32xf32> -> vector<16x32xf32>
    %cst_10 = arith.constant dense<0xFF800000> : vector<16xf32>
    %21 = vector.multi_reduction <maximumf>, %20, %cst_10 [1] : vector<16x32xf32> to vector<16xf32>
    %22 = vector.shape_cast %21 : vector<16xf32> to vector<16x1xf32>
    %23 = vector.broadcast %22 : vector<16x1xf32> to vector<16x32xf32>
    %24 = arith.subf %20, %23 : vector<16x32xf32>
    %25 = math.exp %24 : vector<16x32xf32>
    %cst_11 = arith.constant dense<0.000000e+00> : vector<16xf32>
    %26 = vector.multi_reduction <add>, %25, %cst_11 [1] : vector<16x32xf32> to vector<16xf32>
    %27 = vector.shape_cast %26 : vector<16xf32> to vector<16x1xf32>
    %28 = tpu.reciprocal %27 {approx = true} : vector<16x1xf32> -> vector<16x1xf32>
    %29 = arith.truncf %25 : vector<16x32xf32> to vector<16x32xbf16>
    %c0_12 = arith.constant 0 : index
    %c0_13 = arith.constant 0 : index
    %c0_14 = arith.constant 0 : index
    %30 = vector.load %arg22[%c0_12, %c0_13, %c0_14] : memref<4x32x16xbf16, #tpu.memory_space<vmem>>, vector<1x32x16xbf16>
    %31 = vector.shape_cast %30 : vector<1x32x16xbf16> to vector<32x16xbf16>
    %cst_15 = arith.constant dense<0.000000e+00> : vector<16x16xf32>
    %32 = tpu.matmul %29, %31, %cst_15 {dimension_numbers = #tpu.dot_dimension_numbers<[1], [0], [0], [1], [0, 0, 1, 1], [], []>} : vector<16x32xbf16>, vector<32x16xbf16>, vector<16x16xf32> -> vector<16x16xf32>
    %33 = vector.broadcast %28 : vector<16x1xf32> to vector<16x16xf32>
    %34 = arith.mulf %32, %33 : vector<16x16xf32>
    %35 = arith.truncf %34 : vector<16x16xf32> to vector<16x16xbf16>
    %36 = vector.extract_strided_slice %17 {offsets = [0, 16], sizes = [16, 16], strides = [1, 1]} : vector<16x64xbf16> to vector<16x16xbf16>
    %c16 = arith.constant 16 : index
    %c0_16 = arith.constant 0 : index
    %37 = vector.load %arg21[%c16, %c0_16] : memref<64x32xbf16, #tpu.memory_space<vmem>>, vector<16x32xbf16>
    %cst_17 = arith.constant dense<0.000000e+00> : vector<16x32xf32>
    %38 = tpu.matmul %36, %37, %cst_17 {dimension_numbers = #tpu.dot_dimension_numbers<[1], [0], [0], [1], [0, 0, 1, 1], [], []>} : vector<16x16xbf16>, vector<16x32xbf16>, vector<16x32xf32> -> vector<16x32xf32>
    %cst_18 = arith.constant dense<0xFF800000> : vector<16xf32>
    %39 = vector.multi_reduction <maximumf>, %38, %cst_18 [1] : vector<16x32xf32> to vector<16xf32>
    %40 = vector.shape_cast %39 : vector<16xf32> to vector<16x1xf32>
    %41 = vector.broadcast %40 : vector<16x1xf32> to vector<16x32xf32>
    %42 = arith.subf %38, %41 : vector<16x32xf32>
    %43 = math.exp %42 : vector<16x32xf32>
    %cst_19 = arith.constant dense<0.000000e+00> : vector<16xf32>
    %44 = vector.multi_reduction <add>, %43, %cst_19 [1] : vector<16x32xf32> to vector<16xf32>
    %45 = vector.shape_cast %44 : vector<16xf32> to vector<16x1xf32>
    %46 = tpu.reciprocal %45 {approx = true} : vector<16x1xf32> -> vector<16x1xf32>
    %47 = arith.truncf %43 : vector<16x32xf32> to vector<16x32xbf16>
    %c1 = arith.constant 1 : index
    %c0_20 = arith.constant 0 : index
    %c0_21 = arith.constant 0 : index
    %48 = vector.load %arg22[%c1, %c0_20, %c0_21] : memref<4x32x16xbf16, #tpu.memory_space<vmem>>, vector<1x32x16xbf16>
    %49 = vector.shape_cast %48 : vector<1x32x16xbf16> to vector<32x16xbf16>
    %cst_22 = arith.constant dense<0.000000e+00> : vector<16x16xf32>
    %50 = tpu.matmul %47, %49, %cst_22 {dimension_numbers = #tpu.dot_dimension_numbers<[1], [0], [0], [1], [0, 0, 1, 1], [], []>} : vector<16x32xbf16>, vector<32x16xbf16>, vector<16x16xf32> -> vector<16x16xf32>
    %51 = vector.broadcast %46 : vector<16x1xf32> to vector<16x16xf32>
    %52 = arith.mulf %50, %51 : vector<16x16xf32>
    %53 = arith.truncf %52 : vector<16x16xf32> to vector<16x16xbf16>
    %54 = vector.extract_strided_slice %17 {offsets = [0, 32], sizes = [16, 16], strides = [1, 1]} : vector<16x64xbf16> to vector<16x16xbf16>
    %c32 = arith.constant 32 : index
    %c0_23 = arith.constant 0 : index
    %55 = vector.load %arg21[%c32, %c0_23] : memref<64x32xbf16, #tpu.memory_space<vmem>>, vector<16x32xbf16>
    %cst_24 = arith.constant dense<0.000000e+00> : vector<16x32xf32>
    %56 = tpu.matmul %54, %55, %cst_24 {dimension_numbers = #tpu.dot_dimension_numbers<[1], [0], [0], [1], [0, 0, 1, 1], [], []>} : vector<16x16xbf16>, vector<16x32xbf16>, vector<16x32xf32> -> vector<16x32xf32>
    %cst_25 = arith.constant dense<0xFF800000> : vector<16xf32>
    %57 = vector.multi_reduction <maximumf>, %56, %cst_25 [1] : vector<16x32xf32> to vector<16xf32>
    %58 = vector.shape_cast %57 : vector<16xf32> to vector<16x1xf32>
    %59 = vector.broadcast %58 : vector<16x1xf32> to vector<16x32xf32>
    %60 = arith.subf %56, %59 : vector<16x32xf32>
    %61 = math.exp %60 : vector<16x32xf32>
    %cst_26 = arith.constant dense<0.000000e+00> : vector<16xf32>
    %62 = vector.multi_reduction <add>, %61, %cst_26 [1] : vector<16x32xf32> to vector<16xf32>
    %63 = vector.shape_cast %62 : vector<16xf32> to vector<16x1xf32>
    %64 = tpu.reciprocal %63 {approx = true} : vector<16x1xf32> -> vector<16x1xf32>
    %65 = arith.truncf %61 : vector<16x32xf32> to vector<16x32xbf16>
    %c2 = arith.constant 2 : index
    %c0_27 = arith.constant 0 : index
    %c0_28 = arith.constant 0 : index
    %66 = vector.load %arg22[%c2, %c0_27, %c0_28] : memref<4x32x16xbf16, #tpu.memory_space<vmem>>, vector<1x32x16xbf16>
    %67 = vector.shape_cast %66 : vector<1x32x16xbf16> to vector<32x16xbf16>
    %cst_29 = arith.constant dense<0.000000e+00> : vector<16x16xf32>
    %68 = tpu.matmul %65, %67, %cst_29 {dimension_numbers = #tpu.dot_dimension_numbers<[1], [0], [0], [1], [0, 0, 1, 1], [], []>} : vector<16x32xbf16>, vector<32x16xbf16>, vector<16x16xf32> -> vector<16x16xf32>
    %69 = vector.broadcast %64 : vector<16x1xf32> to vector<16x16xf32>
    %70 = arith.mulf %68, %69 : vector<16x16xf32>
    %71 = arith.truncf %70 : vector<16x16xf32> to vector<16x16xbf16>
    %72 = vector.extract_strided_slice %17 {offsets = [0, 48], sizes = [16, 16], strides = [1, 1]} : vector<16x64xbf16> to vector<16x16xbf16>
    %c48 = arith.constant 48 : index
    %c0_30 = arith.constant 0 : index
    %73 = vector.load %arg21[%c48, %c0_30] : memref<64x32xbf16, #tpu.memory_space<vmem>>, vector<16x32xbf16>
    %cst_31 = arith.constant dense<0.000000e+00> : vector<16x32xf32>
    %74 = tpu.matmul %72, %73, %cst_31 {dimension_numbers = #tpu.dot_dimension_numbers<[1], [0], [0], [1], [0, 0, 1, 1], [], []>} : vector<16x16xbf16>, vector<16x32xbf16>, vector<16x32xf32> -> vector<16x32xf32>
    %cst_32 = arith.constant dense<0xFF800000> : vector<16xf32>
    %75 = vector.multi_reduction <maximumf>, %74, %cst_32 [1] : vector<16x32xf32> to vector<16xf32>
    %76 = vector.shape_cast %75 : vector<16xf32> to vector<16x1xf32>
    %77 = vector.broadcast %76 : vector<16x1xf32> to vector<16x32xf32>
    %78 = arith.subf %74, %77 : vector<16x32xf32>
    %79 = math.exp %78 : vector<16x32xf32>
    %cst_33 = arith.constant dense<0.000000e+00> : vector<16xf32>
    %80 = vector.multi_reduction <add>, %79, %cst_33 [1] : vector<16x32xf32> to vector<16xf32>
    %81 = vector.shape_cast %80 : vector<16xf32> to vector<16x1xf32>
    %82 = tpu.reciprocal %81 {approx = true} : vector<16x1xf32> -> vector<16x1xf32>
    %83 = arith.truncf %79 : vector<16x32xf32> to vector<16x32xbf16>
    %c3 = arith.constant 3 : index
    %c0_34 = arith.constant 0 : index
    %c0_35 = arith.constant 0 : index
    %84 = vector.load %arg22[%c3, %c0_34, %c0_35] : memref<4x32x16xbf16, #tpu.memory_space<vmem>>, vector<1x32x16xbf16>
    %85 = vector.shape_cast %84 : vector<1x32x16xbf16> to vector<32x16xbf16>
    %cst_36 = arith.constant dense<0.000000e+00> : vector<16x16xf32>
    %86 = tpu.matmul %83, %85, %cst_36 {dimension_numbers = #tpu.dot_dimension_numbers<[1], [0], [0], [1], [0, 0, 1, 1], [], []>} : vector<16x32xbf16>, vector<32x16xbf16>, vector<16x16xf32> -> vector<16x16xf32>
    %87 = vector.broadcast %82 : vector<16x1xf32> to vector<16x16xf32>
    %88 = arith.mulf %86, %87 : vector<16x16xf32>
    %89 = arith.truncf %88 : vector<16x16xf32> to vector<16x16xbf16>
    %90 = tpu.concatenate %35, %53, %71, %89 in 1 : vector<16x16xbf16>, vector<16x16xbf16>, vector<16x16xbf16>, vector<16x16xbf16> -> vector<16x64xbf16>
    %c0_37 = arith.constant 0 : index
    %c0_38 = arith.constant 0 : index
    %91 = vector.load %arg11[%c0_37, %c0_38] : memref<64x64xbf16, #tpu.memory_space<vmem>>, vector<64x64xbf16>
    %cst_39 = arith.constant dense<0.000000e+00> : vector<16x64xf32>
    %92 = tpu.matmul %90, %91, %cst_39 {dimension_numbers = #tpu.dot_dimension_numbers<[1], [0], [0], [1], [0, 0, 1, 1], [], []>} : vector<16x64xbf16>, vector<64x64xbf16>, vector<16x64xf32> -> vector<16x64xf32>
    %c0_40 = arith.constant 0 : index
    %c0_41 = arith.constant 0 : index
    %93 = vector.load %arg12[%c0_40, %c0_41] : memref<1x64xf32, #tpu.memory_space<vmem>>, vector<1x64xf32>
    %94 = vector.shape_cast %93 : vector<1x64xf32> to vector<64xf32>
    %95 = vector.shape_cast %94 : vector<64xf32> to vector<1x64xf32>
    %96 = vector.broadcast %95 : vector<1x64xf32> to vector<16x64xf32>
    %97 = arith.addf %92, %96 : vector<16x64xf32>
    %98 = arith.addf %7, %97 : vector<16x64xf32>
    %c0_42 = arith.constant 0 : index
    %c0_43 = arith.constant 0 : index
    %99 = vector.load %arg13[%c0_42, %c0_43] : memref<1x64xf32, #tpu.memory_space<vmem>>, vector<1x64xf32>
    %100 = vector.shape_cast %99 : vector<1x64xf32> to vector<64xf32>
    %c0_44 = arith.constant 0 : index
    %c0_45 = arith.constant 0 : index
    %101 = vector.load %arg14[%c0_44, %c0_45] : memref<1x64xf32, #tpu.memory_space<vmem>>, vector<1x64xf32>
    %102 = vector.shape_cast %101 : vector<1x64xf32> to vector<64xf32>
    %cst_46 = arith.constant dense<0.000000e+00> : vector<16xf32>
    %103 = vector.multi_reduction <add>, %98, %cst_46 [1] : vector<16x64xf32> to vector<16xf32>
    %104 = vector.shape_cast %103 : vector<16xf32> to vector<16x1xf32>
    %cst_47 = arith.constant 6.400000e+01 : f32
    %105 = vector.broadcast %cst_47 : f32 to vector<16x1xf32>
    %106 = arith.divf %104, %105 : vector<16x1xf32>
    %107 = vector.broadcast %106 : vector<16x1xf32> to vector<16x64xf32>
    %108 = arith.subf %98, %107 : vector<16x64xf32>
    %109 = arith.mulf %108, %108 : vector<16x64xf32>
    %cst_48 = arith.constant dense<0.000000e+00> : vector<16xf32>
    %110 = vector.multi_reduction <add>, %109, %cst_48 [1] : vector<16x64xf32> to vector<16xf32>
    %111 = vector.shape_cast %110 : vector<16xf32> to vector<16x1xf32>
    %cst_49 = arith.constant 6.400000e+01 : f32
    %112 = vector.broadcast %cst_49 : f32 to vector<16x1xf32>
    %113 = arith.divf %111, %112 : vector<16x1xf32>
    %114 = vector.broadcast %106 : vector<16x1xf32> to vector<16x64xf32>
    %115 = arith.subf %98, %114 : vector<16x64xf32>
    %cst_50 = arith.constant 9.99999974E-6 : f32
    %116 = vector.broadcast %cst_50 : f32 to vector<16x1xf32>
    %117 = arith.addf %113, %116 : vector<16x1xf32>
    %118 = math.rsqrt %117 : vector<16x1xf32>
    %119 = vector.broadcast %118 : vector<16x1xf32> to vector<16x64xf32>
    %120 = arith.mulf %115, %119 : vector<16x64xf32>
    %121 = vector.shape_cast %100 : vector<64xf32> to vector<1x64xf32>
    %122 = vector.broadcast %121 : vector<1x64xf32> to vector<16x64xf32>
    %123 = arith.mulf %120, %122 : vector<16x64xf32>
    %124 = vector.shape_cast %102 : vector<64xf32> to vector<1x64xf32>
    %125 = vector.broadcast %124 : vector<1x64xf32> to vector<16x64xf32>
    %126 = arith.addf %123, %125 : vector<16x64xf32>
    %127 = arith.truncf %126 : vector<16x64xf32> to vector<16x64xbf16>
    %c0_51 = arith.constant 0 : index
    %c0_52 = arith.constant 0 : index
    %128 = vector.load %arg15[%c0_51, %c0_52] : memref<64x256xbf16, #tpu.memory_space<vmem>>, vector<64x256xbf16>
    %cst_53 = arith.constant dense<0.000000e+00> : vector<16x256xf32>
    %129 = tpu.matmul %127, %128, %cst_53 {dimension_numbers = #tpu.dot_dimension_numbers<[1], [0], [0], [1], [0, 0, 1, 1], [], []>} : vector<16x64xbf16>, vector<64x256xbf16>, vector<16x256xf32> -> vector<16x256xf32>
    %c0_54 = arith.constant 0 : index
    %c0_55 = arith.constant 0 : index
    %130 = vector.load %arg16[%c0_54, %c0_55] : memref<1x256xf32, #tpu.memory_space<vmem>>, vector<1x256xf32>
    %131 = vector.shape_cast %130 : vector<1x256xf32> to vector<256xf32>
    %132 = vector.shape_cast %131 : vector<256xf32> to vector<1x256xf32>
    %133 = vector.broadcast %132 : vector<1x256xf32> to vector<16x256xf32>
    %134 = arith.addf %129, %133 : vector<16x256xf32>
    %cst_56 = arith.constant 5.000000e-01 : f32
    %135 = vector.broadcast %cst_56 : f32 to vector<16x256xf32>
    %136 = arith.mulf %135, %134 : vector<16x256xf32>
    %cst_57 = arith.constant 0.707106769 : f32
    %137 = vector.broadcast %cst_57 : f32 to vector<16x256xf32>
    %138 = arith.mulf %134, %137 : vector<16x256xf32>
    %139 = math.erf %138 : vector<16x256xf32>
    %cst_58 = arith.constant 1.000000e+00 : f32
    %140 = vector.broadcast %cst_58 : f32 to vector<16x256xf32>
    %141 = arith.addf %140, %139 : vector<16x256xf32>
    %142 = arith.mulf %136, %141 : vector<16x256xf32>
    %143 = arith.truncf %142 : vector<16x256xf32> to vector<16x256xbf16>
    %c0_59 = arith.constant 0 : index
    %c0_60 = arith.constant 0 : index
    %144 = vector.load %arg17[%c0_59, %c0_60] : memref<256x64xbf16, #tpu.memory_space<vmem>>, vector<256x64xbf16>
    %cst_61 = arith.constant dense<0.000000e+00> : vector<16x64xf32>
    %145 = tpu.matmul %143, %144, %cst_61 {dimension_numbers = #tpu.dot_dimension_numbers<[1], [0], [0], [1], [0, 0, 1, 1], [], []>} : vector<16x256xbf16>, vector<256x64xbf16>, vector<16x64xf32> -> vector<16x64xf32>
    %c0_62 = arith.constant 0 : index
    %c0_63 = arith.constant 0 : index
    %146 = vector.load %arg18[%c0_62, %c0_63] : memref<1x64xf32, #tpu.memory_space<vmem>>, vector<1x64xf32>
    %147 = vector.shape_cast %146 : vector<1x64xf32> to vector<64xf32>
    %148 = vector.shape_cast %147 : vector<64xf32> to vector<1x64xf32>
    %149 = vector.broadcast %148 : vector<1x64xf32> to vector<16x64xf32>
    %150 = arith.addf %145, %149 : vector<16x64xf32>
    %151 = arith.addf %98, %150 : vector<16x64xf32>
    %c0_64 = arith.constant 0 : index
    %c0_65 = arith.constant 0 : index
    %c0_66 = arith.constant 0 : index
    %152 = vector.load %arg19[%c0_64, %c0_65, %c0_66] : memref<1x16x64xf32, #tpu.memory_space<vmem>>, vector<1x16x64xf32>
    %153 = vector.shape_cast %152 : vector<1x16x64xf32> to vector<16x64xf32>
    %154 = vector.shape_cast %151 : vector<16x64xf32> to vector<1x16x64xf32>
    tpu.vector_store %arg19[%c0_64, %c0_65, %c0_66], %154 {strides = array<i32>} : memref<1x16x64xf32, #tpu.memory_space<vmem>>, vector<1x16x64xf32>,
    return
  }
  func.func @transform_0(%arg0: i32, %arg1: i32) -> (i32, i32, i32) {
    %c0_i32 = arith.constant 0 : i32
    %c0_i32_0 = arith.constant 0 : i32
    %c0_i32_1 = arith.constant 0 : i32
    return %arg0, %c0_i32, %c0_i32_0 : i32, i32, i32
  }
  func.func @transform_1(%arg0: i32, %arg1: i32) -> (i32, i32) {
    %c0_i32 = arith.constant 0 : i32
    %c0_i32_0 = arith.constant 0 : i32
    %c0_i32_1 = arith.constant 0 : i32
    return %c0_i32, %c0_i32_0 : i32, i32
  }
  func.func @transform_2(%arg0: i32, %arg1: i32) -> (i32, i32) {
    %c0_i32 = arith.constant 0 : i32
    %c0_i32_0 = arith.constant 0 : i32
    %c0_i32_1 = arith.constant 0 : i32
    return %c0_i32, %c0_i32_0 : i32, i32
  }
  func.func @transform_3(%arg0: i32, %arg1: i32) -> (i32, i32) {
    %c0_i32 = arith.constant 0 : i32
    %c0_i32_0 = arith.constant 0 : i32
    %c0_i32_1 = arith.constant 0 : i32
    return %c0_i32, %c0_i32_0 : i32, i32
  }
  func.func @transform_4(%arg0: i32, %arg1: i32) -> (i32, i32) {
    %c0_i32 = arith.constant 0 : i32
    %c0_i32_0 = arith.constant 0 : i32
    %c0_i32_1 = arith.constant 0 : i32
    return %c0_i32, %c0_i32_0 : i32, i32
  }
  func.func @transform_5(%arg0: i32, %arg1: i32) -> (i32, i32) {
    %c0_i32 = arith.constant 0 : i32
    %c0_i32_0 = arith.constant 0 : i32
    %c0_i32_1 = arith.constant 0 : i32
    return %c0_i32, %c0_i32_0 : i32, i32
  }
  func.func @transform_6(%arg0: i32, %arg1: i32) -> (i32, i32) {
    %c0_i32 = arith.constant 0 : i32
    %c0_i32_0 = arith.constant 0 : i32
    %c0_i32_1 = arith.constant 0 : i32
    return %c0_i32, %c0_i32_0 : i32, i32
  }
  func.func @transform_7(%arg0: i32, %arg1: i32) -> (i32, i32) {
    %c0_i32 = arith.constant 0 : i32
    %c0_i32_0 = arith.constant 0 : i32
    %c0_i32_1 = arith.constant 0 : i32
    return %c0_i32, %c0_i32_0 : i32, i32
  }
  func.func @transform_8(%arg0: i32, %arg1: i32) -> (i32, i32) {
    %c0_i32 = arith.constant 0 : i32
    %c0_i32_0 = arith.constant 0 : i32
    %c0_i32_1 = arith.constant 0 : i32
    return %c0_i32, %c0_i32_0 : i32, i32
  }
  func.func @transform_9(%arg0: i32, %arg1: i32) -> (i32, i32) {
    %c0_i32 = arith.constant 0 : i32
    %c0_i32_0 = arith.constant 0 : i32
    %c0_i32_1 = arith.constant 0 : i32
    return %c0_i32, %c0_i32_0 : i32, i32
  }
  func.func @transform_10(%arg0: i32, %arg1: i32) -> (i32, i32) {
    %c0_i32 = arith.constant 0 : i32
    %c0_i32_0 = arith.constant 0 : i32
    %c0_i32_1 = arith.constant 0 : i32
    return %c0_i32, %c0_i32_0 : i32, i32
  }
  func.func @transform_11(%arg0: i32, %arg1: i32) -> (i32, i32) {
    %c0_i32 = arith.constant 0 : i32
    %c0_i32_0 = arith.constant 0 : i32
    %c0_i32_1 = arith.constant 0 : i32
    return %c0_i32, %c0_i32_0 : i32, i32
  }
  func.func @transform_12(%arg0: i32, %arg1: i32) -> (i32, i32) {
    %c0_i32 = arith.constant 0 : i32
    %c0_i32_0 = arith.constant 0 : i32
    %c0_i32_1 = arith.constant 0 : i32
    return %c0_i32, %c0_i32_0 : i32, i32
  }
  func.func @transform_13(%arg0: i32, %arg1: i32) -> (i32, i32) {
    %c0_i32 = arith.constant 0 : i32
    %c0_i32_0 = arith.constant 0 : i32
    %c0_i32_1 = arith.constant 0 : i32
    return %c0_i32, %c0_i32_0 : i32, i32
  }
  func.func @transform_14(%arg0: i32, %arg1: i32) -> (i32, i32) {
    %c0_i32 = arith.constant 0 : i32
    %c0_i32_0 = arith.constant 0 : i32
    %c0_i32_1 = arith.constant 0 : i32
    return %c0_i32, %c0_i32_0 : i32, i32
  }
  func.func @transform_15(%arg0: i32, %arg1: i32) -> (i32, i32) {
    %c0_i32 = arith.constant 0 : i32
    %c0_i32_0 = arith.constant 0 : i32
    %c0_i32_1 = arith.constant 0 : i32
    return %c0_i32, %c0_i32_0 : i32, i32
  }
  func.func @transform_16(%arg0: i32, %arg1: i32) -> (i32, i32) {
    %c0_i32 = arith.constant 0 : i32
    %c0_i32_0 = arith.constant 0 : i32
    %c0_i32_1 = arith.constant 0 : i32
    return %c0_i32, %c0_i32_0 : i32, i32
  }
  func.func @transform_17(%arg0: i32, %arg1: i32) -> (i32, i32, i32) {
    %c0_i32 = arith.constant 0 : i32
    %c0_i32_0 = arith.constant 0 : i32
    return %arg0, %arg1, %c0_i32 : i32, i32, i32
  }
}

</mosaic_0001>

<llo_original>
// kernel: tpu_custom_call.1
$region0: #{tpu_custom_call.1}
  #allocation0 [shape = 'u32[]', space=smem, size = 0x4, offset = 0x4, fixed_abs, tag = 'smem constant byte address 0x4 - core index']
  #allocation1 [shape = 'u32[72,128]{1,0:T(1,128)}', space=vmem, size = 0x9000, scoped, tag = 'internal scratch']
  #allocation2 [shape = 'bf16[32,64]{1,0:T(8,128)(2,1)}', space=vmem, size = 0x2000, scoped, tag = 'scratch operand']
  #allocation3 [shape = 'bf16[64,32]{1,0:T(8,128)(2,1)}', space=vmem, size = 0x4000, scoped, tag = 'scratch operand']
  #allocation4 [shape = 'bf16[4,32,16]{2,1,0:T(8,128)(2,1)}', space=vmem, size = 0x8000, scoped, tag = 'scratch operand']
  %s0 = inlined_call_operand.vmem [shape: f32[2,32,64], index: 0, kind: input, shape index: {}]
  %s1 = inlined_call_operand.hbm [shape: f32[1,64], index: 1, kind: input, shape index: {}]
  %s2 = inlined_call_operand.hbm [shape: f32[1,64], index: 2, kind: input, shape index: {}]
  %s3 = inlined_call_operand.vmem [shape: bf16[64,64], index: 3, kind: input, shape index: {}]
  %s4 = inlined_call_operand.hbm [shape: f32[1,64], index: 4, kind: input, shape index: {}]
  %s5 = inlined_call_operand.vmem [shape: bf16[64,64], index: 5, kind: input, shape index: {}]
  %s6 = inlined_call_operand.vmem [shape: f32[1,64], index: 6, kind: input, shape index: {}]
  %s7 = inlined_call_operand.hbm [shape: bf16[64,64], index: 7, kind: input, shape index: {}]
  %s8 = inlined_call_operand.vmem [shape: f32[1,64], index: 8, kind: input, shape index: {}]
  %s9 = inlined_call_operand.hbm [shape: bf16[64,64], index: 9, kind: input, shape index: {}]
  %s10 = inlined_call_operand.vmem [shape: f32[1,64], index: 10, kind: input, shape index: {}]
  %s11 = inlined_call_operand.vmem [shape: f32[1,64], index: 11, kind: input, shape index: {}]
  %s12 = inlined_call_operand.vmem [shape: f32[1,64], index: 12, kind: input, shape index: {}]
  %s13 = inlined_call_operand.vmem [shape: bf16[64,256], index: 13, kind: input, shape index: {}]
  %s14 = inlined_call_operand.vmem [shape: f32[1,256], index: 14, kind: input, shape index: {}]
  %s15 = inlined_call_operand.vmem [shape: bf16[256,64], index: 15, kind: input, shape index: {}]
  %s16 = inlined_call_operand.vmem [shape: f32[1,64], index: 16, kind: input, shape index: {}]
  %s17 = inlined_call_operand.hbm [shape: f32[2,32,64], index: 17, kind: output, shape index: {}]
  %s18 = sld [smem:[#allocation0]]
  $region125: #{tpu_custom_call.1} parent=0
    _
  %s20 = ssub.s32 1, %s18
  %s21 = scalar_select 0, %s20, %s18
  $region1: #{tpu_custom_call.1} parent=0
    #allocation5 [shape = 'u8[512]{0}', space=vmem, size = 0x400, scoped, tag = 'input window, operand 1, single buffered']
    #allocation6 [shape = 's32[2]{0}', space=sflag, size = 0x8, scoped, tag = 'scoped memory for tpu_custom_call.1']
    #allocation7 [shape = 's32[2]{0}', space=sflag, size = 0x8, scoped, tag = 'scoped memory for tpu_custom_call.1']
    #allocation8 [shape = 'u8[512]{0}', space=vmem, size = 0x400, scoped, tag = 'input window, operand 2, single buffered']
    #allocation9 [shape = 's32[1]{0}', space=sflag, size = 0x4, scoped, tag = 'scoped memory for tpu_custom_call.1']
    #allocation10 [shape = 'u8[512]{0}', space=vmem, size = 0x400, scoped, tag = 'input window, operand 4, single buffered']
    #allocation11 [shape = 'u8[16384]{0}', space=vmem, size = 0x4000, scoped, tag = 'input window, operand 7, single buffered']
    #allocation12 [shape = 's32[1]{0}', space=sflag, size = 0x4, scoped, tag = 'scoped memory for tpu_custom_call.1']
    #allocation13 [shape = 'u8[16384]{0}', space=vmem, size = 0x4000, scoped, tag = 'input window, operand 9, single buffered']
    #allocation14 [shape = 'u8[16384]{0}', space=vmem, size = 0x4000, scoped, tag = 'output window, operand 0']
    %22 = vsyncpa [#allocation6], 0
    %23 = vsyncpa [#allocation9], 0
    %24 = vsyncpa [#allocation12], 0
    %25 = vsyncpa [#allocation7], 0
    %s26 = scalar_lea.sflag [#allocation7], 1
    %27 = vsyncpa %s26, 0
    loop: start=0, step=1, limit=6
    $region2: #{tpu_custom_call.1} parent=1 // loop_pre_header
      _
    $region3: #{tpu_custom_call.1} parent=1 // loop_header
      %s29 = sphi 0, %s33
      %p30 = scmp.ge.s32.totalorder %s29, 6
      %s36 = sphi 0, %s48
      %s37 = sphi 0, %s44
      %s38 = sphi 0, %s36
      %s39 = sphi 0, %s37
      %s40 = sphi 0, %s38
      %s41 = sphi 0, %s39
      %s51 = sphi 0, %s53
      %s54 = sphi 0, %s51
      %s55 = sphi 0, %s54
      %s71 = sphi 0, %s55
      %s75 = sphi 0, %s75
      %s77 = sphi 0, %s75
      %s78 = sphi 0, %s77
      %s92 = sphi 0, %s78
      %s96 = sphi 0, %s96
      %s98 = sphi 0, %s96
      %s99 = sphi 0, %s98
      %s113 = sphi 0, %s99
      %s117 = sphi 0, %s117
      %s119 = sphi 0, %s117
      %s120 = sphi 0, %s119
      %s134 = sphi 0, %s120
      %s138 = sphi 0, %s138
      %s140 = sphi 0, %s138
      %s141 = sphi 0, %s140
      %s155 = sphi 0, %s141
      %s159 = sphi 0, %s159
      %s161 = sphi 0, %s159
      %s162 = sphi 0, %s161
      %s176 = sphi 0, %s162
      %s180 = sphi 0, %s180
      %s182 = sphi 0, %s180
      %s183 = sphi 0, %s182
      %s197 = sphi 0, %s183
      %s201 = sphi 0, %s201
      %s203 = sphi 0, %s201
      %s204 = sphi 0, %s203
      %s218 = sphi 0, %s204
      %s222 = sphi 0, %s222
      %s224 = sphi 0, %s222
      %s225 = sphi 0, %s224
      %s239 = sphi 0, %s225
      %s243 = sphi 0, %s243
      %s245 = sphi 0, %s243
      %s246 = sphi 0, %s245
      %s260 = sphi 0, %s246
      %s264 = sphi 0, %s264
      %s266 = sphi 0, %s264
      %s267 = sphi 0, %s266
      %s281 = sphi 0, %s267
      %s285 = sphi 0, %s285
      %s287 = sphi 0, %s285
      %s288 = sphi 0, %s287
      %s302 = sphi 0, %s288
      %s306 = sphi 0, %s306
      %s308 = sphi 0, %s306
      %s309 = sphi 0, %s308
      %s323 = sphi 0, %s309
      %s327 = sphi 0, %s327
      %s329 = sphi 0, %s327
      %s330 = sphi 0, %s329
      %s344 = sphi 0, %s330
      %s348 = sphi 0, %s348
      %s350 = sphi 0, %s348
      %s351 = sphi 0, %s350
      %s365 = sphi 0, %s351
      %s369 = sphi 0, %s369
      %s371 = sphi 0, %s369
      %s372 = sphi 0, %s371
      %s386 = sphi 0, %s372
      %s390 = sphi 0, %s390
      %s392 = sphi 0, %s390
      %s393 = sphi 0, %s392
      %s407 = sphi 0, %s393
      %s415 = sphi 0, %s417
      %s418 = sphi 0, %s415
      %s419 = sphi 0, %s418
      %s435 = sphi 0, %s419
    $region4: #{tpu_custom_call.1} parent=1 // loop_header_branch
      %32 = sbr.rel (%p30) target = $region8
    $region5: #{tpu_custom_call.1} parent=1 // loop_body
      %s34 = ssub.s32 %s29, 1
      %s35 = ssub.s32 %s29, 2
      %s42 = sadd.s32 1, %s37
      %p43 = scmp.ge.s32.totalorder %s42, 2
      %s44 = scalar_select %p43, 0, %s42
      %s45 = sadd.s32 1, %s36
      %s46 = scalar_select %p43, %s45, %s36
      %p47 = scmp.ge.s32.totalorder %s46, 2
      %s48 = scalar_select %p47, 0, %s46
      %s49 = ssub.s32 %s36, %s48
      %p50 = scmp.eq.s32.totalorder %s49, 0
      %s52 = sadd.s32 %s51, 1
      %s53 = scalar_select %p50, %s51, %s52
      %p56 = pneg %p50
      %p57 = scmp.eq.s32.totalorder %s29, 3
      %p58 = por %p56, %p57
      %p59 = scmp.ne.s32.totalorder %s51, %s54
      %p60 = scmp.eq.s32.totalorder %s29, 0
      %p61 = por %p59, %p60
      %p62 = scmp.ne.s32.totalorder %s51, %s54
      %p63 = scmp.eq.s32.totalorder %s34, 3
      %p64 = por %p62, %p63
      %p65 = scmp.ne.s32.totalorder %s54, %s55
      %p66 = scmp.eq.s32.totalorder %s34, 0
      %p67 = por %p65, %p66
      %p68 = scmp.ne.s32.totalorder %s54, %s55
      %p69 = scmp.eq.s32.totalorder %s35, 3
      %p70 = por %p68, %p69
      %p72 = scmp.ne.s32.totalorder %s55, %s71
      %p73 = scmp.eq.s32.totalorder %s35, 0
      %p74 = por %p72, %p73
      %s76 = sadd.s32 %s75, 1
      %p79 = scmp.eq.s32.totalorder %s29, 3
      %p80 = scmp.ne.s32.totalorder %s75, %s77
      %p81 = scmp.eq.s32.totalorder %s29, 0
      %p82 = por %p80, %p81
      %p83 = scmp.ne.s32.totalorder %s75, %s77
      %p84 = scmp.eq.s32.totalorder %s34, 3
      %p85 = por %p83, %p84
      %p86 = scmp.ne.s32.totalorder %s77, %s78
      %p87 = scmp.eq.s32.totalorder %s34, 0
      %p88 = por %p86, %p87
      %p89 = scmp.ne.s32.totalorder %s77, %s78
      %p90 = scmp.eq.s32.totalorder %s35, 3
      %p91 = por %p89, %p90
      %p93 = scmp.ne.s32.totalorder %s78, %s92
      %p94 = scmp.eq.s32.totalorder %s35, 0
      %p95 = por %p93, %p94
      %s97 = sadd.s32 %s96, 1
      %p100 = scmp.eq.s32.totalorder %s29, 3
      %p101 = scmp.ne.s32.totalorder %s96, %s98
      %p102 = scmp.eq.s32.totalorder %s29, 0
      %p103 = por %p101, %p102
      %p104 = scmp.ne.s32.totalorder %s96, %s98
      %p105 = scmp.eq.s32.totalorder %s34, 3
      %p106 = por %p104, %p105
      %p107 = scmp.ne.s32.totalorder %s98, %s99
      %p108 = scmp.eq.s32.totalorder %s34, 0
      %p109 = por %p107, %p108
      %p110 = scmp.ne.s32.totalorder %s98, %s99
      %p111 = scmp.eq.s32.totalorder %s35, 3
      %p112 = por %p110, %p111
      %p114 = scmp.ne.s32.totalorder %s99, %s113
      %p115 = scmp.eq.s32.totalorder %s35, 0
      %p116 = por %p114, %p115
      %s118 = sadd.s32 %s117, 1
      %p121 = scmp.eq.s32.totalorder %s29, 3
      %p122 = scmp.ne.s32.totalorder %s117, %s119
      %p123 = scmp.eq.s32.totalorder %s29, 0
      %p124 = por %p122, %p123
      %p125 = scmp.ne.s32.totalorder %s117, %s119
      %p126 = scmp.eq.s32.totalorder %s34, 3
      %p127 = por %p125, %p126
      %p128 = scmp.ne.s32.totalorder %s119, %s120
      %p129 = scmp.eq.s32.totalorder %s34, 0
      %p130 = por %p128, %p129
      %p131 = scmp.ne.s32.totalorder %s119, %s120
      %p132 = scmp.eq.s32.totalorder %s35, 3
      %p133 = por %p131, %p132
      %p135 = scmp.ne.s32.totalorder %s120, %s134
      %p136 = scmp.eq.s32.totalorder %s35, 0
      %p137 = por %p135, %p136
      %s139 = sadd.s32 %s138, 1
      %p142 = scmp.eq.s32.totalorder %s29, 3
      %p143 = scmp.ne.s32.totalorder %s138, %s140
      %p144 = scmp.eq.s32.totalorder %s29, 0
      %p145 = por %p143, %p144
      %p146 = scmp.ne.s32.totalorder %s138, %s140
      %p147 = scmp.eq.s32.totalorder %s34, 3
      %p148 = por %p146, %p147
      %p149 = scmp.ne.s32.totalorder %s140, %s141
      %p150 = scmp.eq.s32.totalorder %s34, 0
      %p151 = por %p149, %p150
      %p152 = scmp.ne.s32.totalorder %s140, %s141
      %p153 = scmp.eq.s32.totalorder %s35, 3
      %p154 = por %p152, %p153
      %p156 = scmp.ne.s32.totalorder %s141, %s155
      %p157 = scmp.eq.s32.totalorder %s35, 0
      %p158 = por %p156, %p157
      %s160 = sadd.s32 %s159, 1
      %p163 = scmp.eq.s32.totalorder %s29, 3
      %p164 = scmp.ne.s32.totalorder %s159, %s161
      %p165 = scmp.eq.s32.totalorder %s29, 0
      %p166 = por %p164, %p165
      %p167 = scmp.ne.s32.totalorder %s159, %s161
      %p168 = scmp.eq.s32.totalorder %s34, 3
      %p169 = por %p167, %p168
      %p170 = scmp.ne.s32.totalorder %s161, %s162
      %p171 = scmp.eq.s32.totalorder %s34, 0
      %p172 = por %p170, %p171
      %p173 = scmp.ne.s32.totalorder %s161, %s162
      %p174 = scmp.eq.s32.totalorder %s35, 3
      %p175 = por %p173, %p174
      %p177 = scmp.ne.s32.totalorder %s162, %s176
      %p178 = scmp.eq.s32.totalorder %s35, 0
      %p179 = por %p177, %p178
      %s181 = sadd.s32 %s180, 1
      %p184 = scmp.eq.s32.totalorder %s29, 3
      %p185 = scmp.ne.s32.totalorder %s180, %s182
      %p186 = scmp.eq.s32.totalorder %s29, 0
      %p187 = por %p185, %p186
      %p188 = scmp.ne.s32.totalorder %s180, %s182
      %p189 = scmp.eq.s32.totalorder %s34, 3
      %p190 = por %p188, %p189
      %p191 = scmp.ne.s32.totalorder %s182, %s183
      %p192 = scmp.eq.s32.totalorder %s34, 0
      %p193 = por %p191, %p192
      %p194 = scmp.ne.s32.totalorder %s182, %s183
      %p195 = scmp.eq.s32.totalorder %s35, 3
      %p196 = por %p194, %p195
      %p198 = scmp.ne.s32.totalorder %s183, %s197
      %p199 = scmp.eq.s32.totalorder %s35, 0
      %p200 = por %p198, %p199
      %s202 = sadd.s32 %s201, 1
      %p205 = scmp.eq.s32.totalorder %s29, 3
      %p206 = scmp.ne.s32.totalorder %s201, %s203
      %p207 = scmp.eq.s32.totalorder %s29, 0
      %p208 = por %p206, %p207
      %p209 = scmp.ne.s32.totalorder %s201, %s203
      %p210 = scmp.eq.s32.totalorder %s34, 3
      %p211 = por %p209, %p210
      %p212 = scmp.ne.s32.totalorder %s203, %s204
      %p213 = scmp.eq.s32.totalorder %s34, 0
      %p214 = por %p212, %p213
      %p215 = scmp.ne.s32.totalorder %s203, %s204
      %p216 = scmp.eq.s32.totalorder %s35, 3
      %p217 = por %p215, %p216
      %p219 = scmp.ne.s32.totalorder %s204, %s218
      %p220 = scmp.eq.s32.totalorder %s35, 0
      %p221 = por %p219, %p220
      %s223 = sadd.s32 %s222, 1
      %p226 = scmp.eq.s32.totalorder %s29, 3
      %p227 = scmp.ne.s32.totalorder %s222, %s224
      %p228 = scmp.eq.s32.totalorder %s29, 0
      %p229 = por %p227, %p228
      %p230 = scmp.ne.s32.totalorder %s222, %s224
      %p231 = scmp.eq.s32.totalorder %s34, 3
      %p232 = por %p230, %p231
      %p233 = scmp.ne.s32.totalorder %s224, %s225
      %p234 = scmp.eq.s32.totalorder %s34, 0
      %p235 = por %p233, %p234
      %p236 = scmp.ne.s32.totalorder %s224, %s225
      %p237 = scmp.eq.s32.totalorder %s35, 3
      %p238 = por %p236, %p237
      %p240 = scmp.ne.s32.totalorder %s225, %s239
      %p241 = scmp.eq.s32.totalorder %s35, 0
      %p242 = por %p240, %p241
      %s244 = sadd.s32 %s243, 1
      %p247 = scmp.eq.s32.totalorder %s29, 3
      %p248 = scmp.ne.s32.totalorder %s243, %s245
      %p249 = scmp.eq.s32.totalorder %s29, 0
      %p250 = por %p248, %p249
      %p251 = scmp.ne.s32.totalorder %s243, %s245
      %p252 = scmp.eq.s32.totalorder %s34, 3
      %p253 = por %p251, %p252
      %p254 = scmp.ne.s32.totalorder %s245, %s246
      %p255 = scmp.eq.s32.totalorder %s34, 0
      %p256 = por %p254, %p255
      %p257 = scmp.ne.s32.totalorder %s245, %s246
      %p258 = scmp.eq.s32.totalorder %s35, 3
      %p259 = por %p257, %p258
      %p261 = scmp.ne.s32.totalorder %s246, %s260
      %p262 = scmp.eq.s32.totalorder %s35, 0
      %p263 = por %p261, %p262
      %s265 = sadd.s32 %s264, 1
      %p268 = scmp.eq.s32.totalorder %s29, 3
      %p269 = scmp.ne.s32.totalorder %s264, %s266
      %p270 = scmp.eq.s32.totalorder %s29, 0
      %p271 = por %p269, %p270
      %p272 = scmp.ne.s32.totalorder %s264, %s266
      %p273 = scmp.eq.s32.totalorder %s34, 3
      %p274 = por %p272, %p273
      %p275 = scmp.ne.s32.totalorder %s266, %s267
      %p276 = scmp.eq.s32.totalorder %s34, 0
      %p277 = por %p275, %p276
      %p278 = scmp.ne.s32.totalorder %s266, %s267
      %p279 = scmp.eq.s32.totalorder %s35, 3
      %p280 = por %p278, %p279
      %p282 = scmp.ne.s32.totalorder %s267, %s281
      %p283 = scmp.eq.s32.totalorder %s35, 0
      %p284 = por %p282, %p283
      %s286 = sadd.s32 %s285, 1
      %p289 = scmp.eq.s32.totalorder %s29, 3
      %p290 = scmp.ne.s32.totalorder %s285, %s287
      %p291 = scmp.eq.s32.totalorder %s29, 0
      %p292 = por %p290, %p291
      %p293 = scmp.ne.s32.totalorder %s285, %s287
      %p294 = scmp.eq.s32.totalorder %s34, 3
      %p295 = por %p293, %p294
      %p296 = scmp.ne.s32.totalorder %s287, %s288
      %p297 = scmp.eq.s32.totalorder %s34, 0
      %p298 = por %p296, %p297
      %p299 = scmp.ne.s32.totalorder %s287, %s288
      %p300 = scmp.eq.s32.totalorder %s35, 3
      %p301 = por %p299, %p300
      %p303 = scmp.ne.s32.totalorder %s288, %s302
      %p304 = scmp.eq.s32.totalorder %s35, 0
      %p305 = por %p303, %p304
      %s307 = sadd.s32 %s306, 1
      %p310 = scmp.eq.s32.totalorder %s29, 3
      %p311 = scmp.ne.s32.totalorder %s306, %s308
      %p312 = scmp.eq.s32.totalorder %s29, 0
      %p313 = por %p311, %p312
      %p314 = scmp.ne.s32.totalorder %s306, %s308
      %p315 = scmp.eq.s32.totalorder %s34, 3
      %p316 = por %p314, %p315
      %p317 = scmp.ne.s32.totalorder %s308, %s309
      %p318 = scmp.eq.s32.totalorder %s34, 0
      %p319 = por %p317, %p318
      %p320 = scmp.ne.s32.totalorder %s308, %s309
      %p321 = scmp.eq.s32.totalorder %s35, 3
      %p322 = por %p320, %p321
      %p324 = scmp.ne.s32.totalorder %s309, %s323
      %p325 = scmp.eq.s32.totalorder %s35, 0
      %p326 = por %p324, %p325
      %s328 = sadd.s32 %s327, 1
      %p331 = scmp.eq.s32.totalorder %s29, 3
      %p332 = scmp.ne.s32.totalorder %s327, %s329
      %p333 = scmp.eq.s32.totalorder %s29, 0
      %p334 = por %p332, %p333
      %p335 = scmp.ne.s32.totalorder %s327, %s329
      %p336 = scmp.eq.s32.totalorder %s34, 3
      %p337 = por %p335, %p336
      %p338 = scmp.ne.s32.totalorder %s329, %s330
      %p339 = scmp.eq.s32.totalorder %s34, 0
      %p340 = por %p338, %p339
      %p341 = scmp.ne.s32.totalorder %s329, %s330
      %p342 = scmp.eq.s32.totalorder %s35, 3
      %p343 = por %p341, %p342
      %p345 = scmp.ne.s32.totalorder %s330, %s344
      %p346 = scmp.eq.s32.totalorder %s35, 0
      %p347 = por %p345, %p346
      %s349 = sadd.s32 %s348, 1
      %p352 = scmp.eq.s32.totalorder %s29, 3
      %p353 = scmp.ne.s32.totalorder %s348, %s350
      %p354 = scmp.eq.s32.totalorder %s29, 0
      %p355 = por %p353, %p354
      %p356 = scmp.ne.s32.totalorder %s348, %s350
      %p357 = scmp.eq.s32.totalorder %s34, 3
      %p358 = por %p356, %p357
      %p359 = scmp.ne.s32.totalorder %s350, %s351
      %p360 = scmp.eq.s32.totalorder %s34, 0
      %p361 = por %p359, %p360
      %p362 = scmp.ne.s32.totalorder %s350, %s351
      %p363 = scmp.eq.s32.totalorder %s35, 3
      %p364 = por %p362, %p363
      %p366 = scmp.ne.s32.totalorder %s351, %s365
      %p367 = scmp.eq.s32.totalorder %s35, 0
      %p368 = por %p366, %p367
      %s370 = sadd.s32 %s369, 1
      %p373 = scmp.eq.s32.totalorder %s29, 3
      %p374 = scmp.ne.s32.totalorder %s369, %s371
      %p375 = scmp.eq.s32.totalorder %s29, 0
      %p376 = por %p374, %p375
      %p377 = scmp.ne.s32.totalorder %s369, %s371
      %p378 = scmp.eq.s32.totalorder %s34, 3
      %p379 = por %p377, %p378
      %p380 = scmp.ne.s32.totalorder %s371, %s372
      %p381 = scmp.eq.s32.totalorder %s34, 0
      %p382 = por %p380, %p381
      %p383 = scmp.ne.s32.totalorder %s371, %s372
      %p384 = scmp.eq.s32.totalorder %s35, 3
      %p385 = por %p383, %p384
      %p387 = scmp.ne.s32.totalorder %s372, %s386
      %p388 = scmp.eq.s32.totalorder %s35, 0
      %p389 = por %p387, %p388
      %s391 = sadd.s32 %s390, 1
      %p394 = scmp.eq.s32.totalorder %s29, 3
      %p395 = scmp.ne.s32.totalorder %s390, %s392
      %p396 = scmp.eq.s32.totalorder %s29, 0
      %p397 = por %p395, %p396
      %p398 = scmp.ne.s32.totalorder %s390, %s392
      %p399 = scmp.eq.s32.totalorder %s34, 3
      %p400 = por %p398, %p399
      %p401 = scmp.ne.s32.totalorder %s392, %s393
      %p402 = scmp.eq.s32.totalorder %s34, 0
      %p403 = por %p401, %p402
      %p404 = scmp.ne.s32.totalorder %s392, %s393
      %p405 = scmp.eq.s32.totalorder %s35, 3
      %p406 = por %p404, %p405
      %p408 = scmp.ne.s32.totalorder %s393, %s407
      %p409 = scmp.eq.s32.totalorder %s35, 0
      %p410 = por %p408, %p409
      %s411 = ssub.s32 %s36, %s48
      %s412 = ssub.s32 %s37, %s44
      %s413 = sor.u32 %s411, %s412
      %p414 = scmp.eq.s32.totalorder %s413, 0
      %s416 = sadd.s32 %s415, 1
      %s417 = scalar_select %p414, %s415, %s416
      %p420 = pneg %p414
      %p421 = scmp.eq.s32.totalorder %s29, 3
      %p422 = por %p420, %p421
      %p423 = scmp.ne.s32.totalorder %s415, %s418
      %p424 = scmp.eq.s32.totalorder %s29, 0
      %p425 = por %p423, %p424
      %p426 = scmp.ne.s32.totalorder %s415, %s418
      %p427 = scmp.eq.s32.totalorder %s34, 3
      %p428 = por %p426, %p427
      %p429 = scmp.ne.s32.totalorder %s418, %s419
      %p430 = scmp.eq.s32.totalorder %s34, 0
      %p431 = por %p429, %p430
      %p432 = scmp.ne.s32.totalorder %s418, %s419
      %p433 = scmp.eq.s32.totalorder %s35, 3
      %p434 = por %p432, %p433
      %p436 = scmp.ne.s32.totalorder %s419, %s435
      %p437 = scmp.eq.s32.totalorder %s35, 0
      %p438 = por %p436, %p437
      %p439 = scmp.le.s32.totalorder 1, %s29
      %p440 = scmp.lt.s32.totalorder %s29, 5
      %p441 = pnand %p439, %p440
      %p442 = pneg %p441
      // Predicated region
      $region9: #{tpu_custom_call.1} parent=5 // pred_check
        _
      $region10: #{tpu_custom_call.1} parent=5 // pred_check_branch
        %444 = sbr.rel (%p441) target = $region12
      $region11: #{tpu_custom_call.1} parent=5 // pred_region
        %s445 = ssub.s32 %s29, 1
        // Predicated region
        $region13: #{tpu_custom_call.1} parent=11 // pred_check
          %p446 = pneg %p88
        $region14: #{tpu_custom_call.1} parent=11 // pred_check_branch
          %448 = sbr.rel (%p446) target = $region16
        $region15: #{tpu_custom_call.1} parent=11 // pred_region
          %450 = vsyncadd [#allocation6], 0
          %s452 = sshll.u32 %s1, 4
          %s453 = int_to_ptr.hbm [resolvable:$true] %s452
          %s454 = sshll.u32 [#allocation5], 4
          %s455 = int_to_ptr.vmem [resolvable:$true] %s454
          %457 = dma.hbm_to_vmem [thread:$0]  %s453, 16, %s455, [#allocation6]
        $region16: #{tpu_custom_call.1} parent=11 // pred_fallthru
          _
        // Predicated region
        $region17: #{tpu_custom_call.1} parent=11 // pred_check
          %p458 = pneg %p109
        $region18: #{tpu_custom_call.1} parent=11 // pred_check_branch
          %460 = sbr.rel (%p458) target = $region20
        $region19: #{tpu_custom_call.1} parent=11 // pred_region
          %462 = vsyncadd [#allocation9], 0
          %s464 = sshll.u32 %s2, 4
          %s465 = int_to_ptr.hbm [resolvable:$true] %s464
          %s466 = sshll.u32 [#allocation8], 4
          %s467 = int_to_ptr.vmem [resolvable:$true] %s466
          %469 = dma.hbm_to_vmem [thread:$0]  %s465, 16, %s467, [#allocation9]
        $region20: #{tpu_custom_call.1} parent=11 // pred_fallthru
          _
        // Predicated region
        $region21: #{tpu_custom_call.1} parent=11 // pred_check
          %p470 = pneg %p130
        $region22: #{tpu_custom_call.1} parent=11 // pred_check_branch
          %472 = sbr.rel (%p470) target = $region24
        $region23: #{tpu_custom_call.1} parent=11 // pred_region
          _
        $region24: #{tpu_custom_call.1} parent=11 // pred_fallthru
          _
        // Predicated region
        $region25: #{tpu_custom_call.1} parent=11 // pred_check
          %p473 = pneg %p151
        $region26: #{tpu_custom_call.1} parent=11 // pred_check_branch
          %475 = sbr.rel (%p473) target = $region28
        $region27: #{tpu_custom_call.1} parent=11 // pred_region
          %477 = vsyncadd [#allocation9], 0
          %s479 = sshll.u32 %s4, 4
          %s480 = int_to_ptr.hbm [resolvable:$true] %s479
          %s481 = sshll.u32 [#allocation10], 4
          %s482 = int_to_ptr.vmem [resolvable:$true] %s481
          %484 = dma.hbm_to_vmem [thread:$0]  %s480, 16, %s482, [#allocation9]
        $region28: #{tpu_custom_call.1} parent=11 // pred_fallthru
          _
        // Predicated region
        $region29: #{tpu_custom_call.1} parent=11 // pred_check
          %p485 = pneg %p172
        $region30: #{tpu_custom_call.1} parent=11 // pred_check_branch
          %487 = sbr.rel (%p485) target = $region32
        $region31: #{tpu_custom_call.1} parent=11 // pred_region
          _
        $region32: #{tpu_custom_call.1} parent=11 // pred_fallthru
          _
        // Predicated region
        $region33: #{tpu_custom_call.1} parent=11 // pred_check
          %p488 = pneg %p193
        $region34: #{tpu_custom_call.1} parent=11 // pred_check_branch
          %490 = sbr.rel (%p488) target = $region36
        $region35: #{tpu_custom_call.1} parent=11 // pred_region
          _
        $region36: #{tpu_custom_call.1} parent=11 // pred_fallthru
          _
        // Predicated region
        $region37: #{tpu_custom_call.1} parent=11 // pred_check
          %p491 = pneg %p214
        $region38: #{tpu_custom_call.1} parent=11 // pred_check_branch
          %493 = sbr.rel (%p491) target = $region40
        $region39: #{tpu_custom_call.1} parent=11 // pred_region
          %495 = vsyncadd [#allocation12], 0
          %s496 = sshll.u32 %s7, 4
          %s497 = int_to_ptr.hbm [resolvable:$true] %s496
          %s498 = sshll.u32 [#allocation11], 4
          %s499 = int_to_ptr.vmem [resolvable:$true] %s498
          %504 = dma.hbm_to_vmem [thread:$0]  %s497, 512, %s499, [#allocation12], 64, 64, 4
        $region40: #{tpu_custom_call.1} parent=11 // pred_fallthru
          _
        // Predicated region
        $region41: #{tpu_custom_call.1} parent=11 // pred_check
          %p505 = pneg %p235
        $region42: #{tpu_custom_call.1} parent=11 // pred_check_branch
          %507 = sbr.rel (%p505) target = $region44
        $region43: #{tpu_custom_call.1} parent=11 // pred_region
          _
        $region44: #{tpu_custom_call.1} parent=11 // pred_fallthru
          _
        // Predicated region
        $region45: #{tpu_custom_call.1} parent=11 // pred_check
          %p508 = pneg %p256
        $region46: #{tpu_custom_call.1} parent=11 // pred_check_branch
          %510 = sbr.rel (%p508) target = $region48
        $region47: #{tpu_custom_call.1} parent=11 // pred_region
          %512 = vsyncadd [#allocation12], 0
          %s513 = sshll.u32 %s9, 4
          %s514 = int_to_ptr.hbm [resolvable:$true] %s513
          %s515 = sshll.u32 [#allocation13], 4
          %s516 = int_to_ptr.vmem [resolvable:$true] %s515
          %521 = dma.hbm_to_vmem [thread:$0]  %s514, 512, %s516, [#allocation12], 64, 64, 4
        $region48: #{tpu_custom_call.1} parent=11 // pred_fallthru
          _
        // Predicated region
        $region49: #{tpu_custom_call.1} parent=11 // pred_check
          %p522 = pneg %p277
        $region50: #{tpu_custom_call.1} parent=11 // pred_check_branch
          %524 = sbr.rel (%p522) target = $region52
        $region51: #{tpu_custom_call.1} parent=11 // pred_region
          _
        $region52: #{tpu_custom_call.1} parent=11 // pred_fallthru
          _
        // Predicated region
        $region53: #{tpu_custom_call.1} parent=11 // pred_check
          %p525 = pneg %p298
        $region54: #{tpu_custom_call.1} parent=11 // pred_check_branch
          %527 = sbr.rel (%p525) target = $region56
        $region55: #{tpu_custom_call.1} parent=11 // pred_region
          _
        $region56: #{tpu_custom_call.1} parent=11 // pred_fallthru
          _
        // Predicated region
        $region57: #{tpu_custom_call.1} parent=11 // pred_check
          %p528 = pneg %p319
        $region58: #{tpu_custom_call.1} parent=11 // pred_check_branch
          %530 = sbr.rel (%p528) target = $region60
        $region59: #{tpu_custom_call.1} parent=11 // pred_region
          _
        $region60: #{tpu_custom_call.1} parent=11 // pred_fallthru
          _
        // Predicated region
        $region61: #{tpu_custom_call.1} parent=11 // pred_check
          %p531 = pneg %p340
        $region62: #{tpu_custom_call.1} parent=11 // pred_check_branch
          %533 = sbr.rel (%p531) target = $region64
        $region63: #{tpu_custom_call.1} parent=11 // pred_region
          _
        $region64: #{tpu_custom_call.1} parent=11 // pred_fallthru
          _
        // Predicated region
        $region65: #{tpu_custom_call.1} parent=11 // pred_check
          %p534 = pneg %p361
        $region66: #{tpu_custom_call.1} parent=11 // pred_check_branch
          %536 = sbr.rel (%p534) target = $region68
        $region67: #{tpu_custom_call.1} parent=11 // pred_region
          _
        $region68: #{tpu_custom_call.1} parent=11 // pred_fallthru
          _
        // Predicated region
        $region69: #{tpu_custom_call.1} parent=11 // pred_check
          %p537 = pneg %p382
        $region70: #{tpu_custom_call.1} parent=11 // pred_check_branch
          %539 = sbr.rel (%p537) target = $region72
        $region71: #{tpu_custom_call.1} parent=11 // pred_region
          _
        $region72: #{tpu_custom_call.1} parent=11 // pred_fallthru
          _
        // Predicated region
        $region73: #{tpu_custom_call.1} parent=11 // pred_check
          %p540 = pneg %p403
        $region74: #{tpu_custom_call.1} parent=11 // pred_check_branch
          %542 = sbr.rel (%p540) target = $region76
        $region75: #{tpu_custom_call.1} parent=11 // pred_region
          _
        $region76: #{tpu_custom_call.1} parent=11 // pred_fallthru
          _
      $region12: #{tpu_custom_call.1} parent=5 // pred_fallthru
        _
      %p543 = scmp.lt.s32.totalorder %s29, 4
      // Predicated region
      $region77: #{tpu_custom_call.1} parent=5 // pred_check
        %p544 = pneg %p543
      $region78: #{tpu_custom_call.1} parent=5 // pred_check_branch
        %546 = sbr.rel (%p544) target = $region80
      $region79: #{tpu_custom_call.1} parent=5 // pred_region
        // Predicated region
        $region81: #{tpu_custom_call.1} parent=79 // pred_check
          %p547 = pneg %p61
        $region82: #{tpu_custom_call.1} parent=79 // pred_check_branch
          %549 = sbr.rel (%p547) target = $region84
        $region83: #{tpu_custom_call.1} parent=79 // pred_region
          %p550 = scmp.lt.s32.totalorder %s36, 1
          %s551 = scalar_select %p550, %s36, 1
          %s552 = smul.addr %s551, 4
          %s553 = smul.addr %s552, 8
          %s554 = scalar_lea.vmem %s0, %s553
        $region84: #{tpu_custom_call.1} parent=79 // pred_fallthru
          _
      $region80: #{tpu_custom_call.1} parent=5 // pred_fallthru
        _
      %p555 = scmp.le.s32.totalorder 1, %s29
      %p556 = scmp.lt.s32.totalorder %s29, 5
      %p557 = pnand %p555, %p556
      %p558 = pneg %p557
      // Predicated region
      $region85: #{tpu_custom_call.1} parent=5 // pred_check
        _
      $region86: #{tpu_custom_call.1} parent=5 // pred_check_branch
        %560 = sbr.rel (%p557) target = $region88
      $region87: #{tpu_custom_call.1} parent=5 // pred_region
        %s561 = ssub.s32 %s29, 1
        // Predicated region
        $region89: #{tpu_custom_call.1} parent=87 // pred_check
          %p562 = pneg %p88
        $region90: #{tpu_custom_call.1} parent=87 // pred_check_branch
          %564 = sbr.rel (%p562) target = $region92
        $region91: #{tpu_custom_call.1} parent=87 // pred_region
          %566 = dma.done [#allocation6], 16
        $region92: #{tpu_custom_call.1} parent=87 // pred_fallthru
          _
        // Predicated region
        $region93: #{tpu_custom_call.1} parent=87 // pred_check
          %p567 = pneg %p109
        $region94: #{tpu_custom_call.1} parent=87 // pred_check_branch
          %569 = sbr.rel (%p567) target = $region96
        $region95: #{tpu_custom_call.1} parent=87 // pred_region
          %571 = dma.done [#allocation9], 16
        $region96: #{tpu_custom_call.1} parent=87 // pred_fallthru
          _
        // Predicated region
        $region97: #{tpu_custom_call.1} parent=87 // pred_check
          %p572 = pneg %p151
        $region98: #{tpu_custom_call.1} parent=87 // pred_check_branch
          %574 = sbr.rel (%p572) target = $region100
        $region99: #{tpu_custom_call.1} parent=87 // pred_region
          %576 = dma.done [#allocation9], 16
        $region100: #{tpu_custom_call.1} parent=87 // pred_fallthru
          _
        // Predicated region
        $region101: #{tpu_custom_call.1} parent=87 // pred_check
          %p577 = pneg %p214
        $region102: #{tpu_custom_call.1} parent=87 // pred_check_branch
          %579 = sbr.rel (%p577) target = $region104
        $region103: #{tpu_custom_call.1} parent=87 // pred_region
          %581 = dma.done [#allocation12], 512
        $region104: #{tpu_custom_call.1} parent=87 // pred_fallthru
          _
        // Predicated region
        $region105: #{tpu_custom_call.1} parent=87 // pred_check
          %p582 = pneg %p256
        $region106: #{tpu_custom_call.1} parent=87 // pred_check_branch
          %584 = sbr.rel (%p582) target = $region108
        $region107: #{tpu_custom_call.1} parent=87 // pred_region
          %586 = dma.done [#allocation12], 512
        $region108: #{tpu_custom_call.1} parent=87 // pred_fallthru
          _
        %p587 = scmp.lt.s32.totalorder %s38, 1
        %s588 = scalar_select %p587, %s38, 1
        %s589 = smul.addr %s588, 4
        %s590 = smul.addr %s589, 8
        %s591 = scalar_lea.vmem %s0, %s590
        %p592 = pneg %p67
        %p593 = pneg %p64
        %p594 = pneg %p88
        %p595 = pneg %p85
        %p596 = pneg %p109
        %p597 = pneg %p106
        %p598 = pneg %p130
        %p599 = pneg %p127
        %p600 = pneg %p151
        %p601 = pneg %p148
        %p602 = pneg %p172
        %p603 = pneg %p169
        %p604 = pneg %p193
        %p605 = pneg %p190
        %p606 = pneg %p214
        %p607 = pneg %p211
        %p608 = pneg %p235
        %p609 = pneg %p232
        %p610 = pneg %p256
        %p611 = pneg %p253
        %p612 = pneg %p277
        %p613 = pneg %p274
        %p614 = pneg %p298
        %p615 = pneg %p295
        %p616 = pneg %p319
        %p617 = pneg %p316
        %p618 = pneg %p340
        %p619 = pneg %p337
        %p620 = pneg %p361
        %p621 = pneg %p358
        %p622 = pneg %p382
        %p623 = pneg %p379
        %p624 = pneg %p403
        %p625 = pneg %p400
        %p626 = pneg %p431
        %p627 = pneg %p428
        %s628 = sand.u32 %s418, 1
        %s629 = scalar_lea.sflag [#allocation7], %s628
        %s630 = sand.u32 %s418, 1
        %s631 = smul.addr %s630, 16
        %s632 = scalar_lea.vmem [#allocation14], %s631
        %p633 = scmp.lt.s32.totalorder %s38, 1
        %s634 = scalar_select %p633, %s38, 1
        %s635 = smul.addr %s634, 4
        %s636 = smul.addr %s635, 8
        %s637 = scalar_lea.vmem %s0, %s636
        %s638 = smul.u32 2, %s39
        %p640 = scmp.eq.s32.totalorder %s39, 0
        // Predicated region
        $region109: #{tpu_custom_call.1} parent=87 // pred_check
          %p641 = pneg %p640
        $region110: #{tpu_custom_call.1} parent=87 // pred_check_branch
          %643 = sbr.rel (%p641) target = $region112
        $region111: #{tpu_custom_call.1} parent=87 // pred_region
          %v644 = vld [vmem:[%s637] sm:$0xff]
          %v645 = vld [vmem:[%s637 + $0x8] sm:$0xff]
          %v646 = vld [vmem:[%s637 + $0x10] sm:$0xff]
          %v647 = vld [vmem:[%s637 + $0x18] sm:$0xff]
          %v648 = vld [vmem:[#allocation5] sm:$0x1]
          %v649 = vld [vmem:[#allocation8] sm:$0x1]
          %vm650 = vcmask 523264
          %v651 = vsel %vm650, %v644, 0.0
          %652 = vadd.xlane.f32.xlu0 %v651
          %v653 = vpop.xlane.xlu0 %652
          %v654 = vsel %vm650, %v645, 0.0
          %655 = vadd.xlane.f32.xlu0 %v654
          %v656 = vpop.xlane.xlu0 %655
          %v657 = vsel %vm650, %v646, 0.0
          %658 = vadd.xlane.f32.xlu0 %v657
          %v659 = vpop.xlane.xlu0 %658
          %v660 = vsel %vm650, %v647, 0.0
          %661 = vadd.xlane.f32.xlu0 %v660
          %v662 = vpop.xlane.xlu0 %661
          %v663 = vrcp.pop 64.0
          %v664 = vmul.f32 64.0, %v663
          %v665 = vsub.f32 1.0, %v664
          %v666 = vmul.f32 %v663, %v665
          %v667 = vadd.f32 %v663, %v666
          %vm668 = vweird.f32 %v663
          %v669 = vsel %vm668, %v663, %v667
          %v670 = vmul.f32 %v653, %v669
          %v671 = vmul.f32 %v656, %v669
          %v672 = vmul.f32 %v659, %v669
          %v673 = vmul.f32 %v662, %v669
          %v674 = vsub.f32 %v644, %v670
          %v675 = vsub.f32 %v645, %v671
          %v676 = vsub.f32 %v646, %v672
          %v677 = vsub.f32 %v647, %v673
          %v678 = vmul.f32 %v674, %v674
          %v679 = vmul.f32 %v675, %v675
          %v680 = vmul.f32 %v676, %v676
          %v681 = vmul.f32 %v677, %v677
          %v682 = vsel %vm650, %v678, 0.0
          %683 = vadd.xlane.f32.xlu0 %v682
          %v684 = vpop.xlane.xlu0 %683
          %v685 = vsel %vm650, %v679, 0.0
          %686 = vadd.xlane.f32.xlu0 %v685
          %v687 = vpop.xlane.xlu0 %686
          %v688 = vsel %vm650, %v680, 0.0
          %689 = vadd.xlane.f32.xlu0 %v688
          %v690 = vpop.xlane.xlu0 %689
          %v691 = vsel %vm650, %v681, 0.0
          %692 = vadd.xlane.f32.xlu0 %v691
          %v693 = vpop.xlane.xlu0 %692
          %v694 = vmul.f32 %v684, %v669
          %v695 = vmul.f32 %v687, %v669
          %v696 = vmul.f32 %v690, %v669
          %v697 = vmul.f32 %v693, %v669
          %v698 = vadd.f32 %v694, 1e-05
          %v699 = vadd.f32 %v695, 1e-05
          %v700 = vadd.f32 %v696, 1e-05
          %v701 = vadd.f32 %v697, 1e-05
          %v702 = vrsqrt.pop %v698
          %v703 = vmul.f32 %v702, %v698
          %v704 = vmul.f32 %v703, %v702
          %v705 = vmul.f32 0.5, %v704
          %v706 = vsub.f32 1.5, %v705
          %v707 = vmul.f32 %v702, %v706
          %vm708 = vweird.f32 %v698
          %vm709 = vweird.f32 %v702
          %vm710 = vmor %vm708, %vm709
          %v711 = vsel %vm710, %v702, %v707
          %v712 = vrsqrt.pop %v699
          %v713 = vmul.f32 %v712, %v699
          %v714 = vmul.f32 %v713, %v712
          %v715 = vmul.f32 0.5, %v714
          %v716 = vsub.f32 1.5, %v715
          %v717 = vmul.f32 %v712, %v716
          %vm718 = vweird.f32 %v699
          %vm719 = vweird.f32 %v712
          %vm720 = vmor %vm718, %vm719
          %v721 = vsel %vm720, %v712, %v717
          %v722 = vrsqrt.pop %v700
          %v723 = vmul.f32 %v722, %v700
          %v724 = vmul.f32 %v723, %v722
          %v725 = vmul.f32 0.5, %v724
          %v726 = vsub.f32 1.5, %v725
          %v727 = vmul.f32 %v722, %v726
          %vm728 = vweird.f32 %v700
          %vm729 = vweird.f32 %v722
          %vm730 = vmor %vm728, %vm729
          %v731 = vsel %vm730, %v722, %v727
          %v732 = vrsqrt.pop %v701
          %v733 = vmul.f32 %v732, %v701
          %v734 = vmul.f32 %v733, %v732
          %v735 = vmul.f32 0.5, %v734
          %v736 = vsub.f32 1.5, %v735
          %v737 = vmul.f32 %v732, %v736
          %vm738 = vweird.f32 %v701
          %vm739 = vweird.f32 %v732
          %vm740 = vmor %vm738, %vm739
          %v741 = vsel %vm740, %v732, %v737
          %v742 = vmul.f32 %v674, %v711
          %v743 = vmul.f32 %v675, %v721
          %v744 = vmul.f32 %v676, %v731
          %v745 = vmul.f32 %v677, %v741
          %v747 = vperm.slane %v648, 0
          %v749 = vmul.f32 %v742, %v747
          %v750 = vmul.f32 %v743, %v747
          %v751 = vmul.f32 %v744, %v747
          %v752 = vmul.f32 %v745, %v747
          %v754 = vperm.slane %v649, 0
          %v756 = vadd.f32 %v749, %v754
          %v757 = vadd.f32 %v750, %v754
          %v758 = vadd.f32 %v751, %v754
          %v759 = vadd.f32 %v752, %v754
          %v760 = vpack.c.bf16 %v756, %v756
          %v761 = vpack.c.bf16 %v757, %v757
          %v762 = vpack.c.bf16 %v758, %v758
          %v763 = vpack.c.bf16 %v759, %v759
          %vm764 = vcmask 519168
          %765 = vst.msk [vmem:[#allocation2] sm:$0xf] %vm764, %v760
          %766 = vst.msk [vmem:[#allocation2 + $0x4] sm:$0xf] %vm764, %v761
          %767 = vst.msk [vmem:[#allocation2 + $0x8] sm:$0xf] %vm764, %v762
          %768 = vst.msk [vmem:[#allocation2 + $0xc] sm:$0xf] %vm764, %v763
          %v769 = vld [vmem:[%s5] sm:$0xf]
          %v770 = vld [vmem:[%s5 + $0x4] sm:$0xf]
          %v771 = vld [vmem:[%s5 + $0x8] sm:$0xf]
          %v772 = vld [vmem:[%s5 + $0xc] sm:$0xf]
          %v773 = vld [vmem:[%s5 + $0x10] sm:$0xf]
          %v774 = vld [vmem:[%s5 + $0x14] sm:$0xf]
          %v775 = vld [vmem:[%s5 + $0x18] sm:$0xf]
          %v776 = vld [vmem:[%s5 + $0x1c] sm:$0xf]
          %v777 = vld [vmem:[%s6] sm:$0x1]
          %v779 = vperm.slane %v777, 0
          %v785 = vunpack.c.l.b16 %v760
          %v786 = vunpack.c.l.b16 %v761
          %v787 = vunpack.c.l.b16 %v762
          %v788 = vunpack.c.l.b16 %v763
          %v789 = vpack.c.b16 %v786, %v785
          %v790 = vpack.c.b16 %v788, %v787
          %v799 = vunpack.c.l.b16 %v769
          %v800 = vunpack.c.l.b16 %v770
          %v801 = vunpack.c.l.b16 %v771
          %v802 = vunpack.c.l.b16 %v772
          %v803 = vunpack.c.l.b16 %v773
          %v804 = vunpack.c.l.b16 %v774
          %v805 = vunpack.c.l.b16 %v775
          %v806 = vunpack.c.l.b16 %v776
          %v807 = vpack.c.b16 %v800, %v799
          %v808 = vpack.c.b16 %v802, %v801
          %v809 = vpack.c.b16 %v804, %v803
          %v810 = vpack.c.b16 %v806, %v805
          %v816 = vsel %vm650, %v789, 0
          %v819 = vsel %vm650, %v790, 0
          %821 = vmatpush.bf16.msra.mxu0 0
          %822 = vmatpush.bf16.msra.mxu0 0
          %823 = vmatpush.bf16.msra.mxu0 0
          %824 = vmatpush.bf16.msra.mxu0 0
          %825 = vmatpush.bf16.msra.mxu0 %v810
          %826 = vmatpush.bf16.msra.mxu0 %v809
          %827 = vmatpush.bf16.msra.mxu0 %v808
          %828 = vmatpush.bf16.msra.mxu0 %v807
          %829 = vmatmul.bf16.gmra.mxu0 %v816
          %v830 = vpop.f32.mrf.mxu0
          %v831 = vadd.f32 %v779, %v830
          %v832 = vpop.f32.mrf.mxu0
          %v833 = vadd.f32 %v779, %v832
          %834 = vmatmul.bf16.gmra.mxu0 %v819
          %v835 = vpop.f32.mrf.mxu0
          %v836 = vadd.f32 %v779, %v835
          %v837 = vpop.f32.mrf.mxu0
          %v838 = vadd.f32 %v779, %v837
          %839 = vdwg.mxu0
          %v840 = vld [vmem:[#allocation11] sm:$0xf]
          %v841 = vld [vmem:[#allocation11 + $0x4] sm:$0xf]
          %v842 = vld [vmem:[#allocation11 + $0x8] sm:$0xf]
          %v843 = vld [vmem:[#allocation11 + $0xc] sm:$0xf]
          %v844 = vld [vmem:[#allocation11 + $0x10] sm:$0xf]
          %v845 = vld [vmem:[#allocation11 + $0x14] sm:$0xf]
          %v846 = vld [vmem:[#allocation11 + $0x18] sm:$0xf]
          %v847 = vld [vmem:[#allocation11 + $0x1c] sm:$0xf]
          %v848 = vld [vmem:[%s8] sm:$0x1]
          %v850 = vperm.slane %v848, 0
          %v860 = vunpack.c.l.b16 %v840
          %v861 = vunpack.c.l.b16 %v841
          %v862 = vunpack.c.l.b16 %v842
          %v863 = vunpack.c.l.b16 %v843
          %v864 = vunpack.c.l.b16 %v844
          %v865 = vunpack.c.l.b16 %v845
          %v866 = vunpack.c.l.b16 %v846
          %v867 = vunpack.c.l.b16 %v847
          %v868 = vpack.c.b16 %v861, %v860
          %v869 = vpack.c.b16 %v863, %v862
          %v870 = vpack.c.b16 %v865, %v864
          %v871 = vpack.c.b16 %v867, %v866
          %876 = vmatpush.bf16.msra.mxu0 0
          %877 = vmatpush.bf16.msra.mxu0 0
          %878 = vmatpush.bf16.msra.mxu0 0
          %879 = vmatpush.bf16.msra.mxu0 0
          %880 = vmatpush.bf16.msra.mxu0 %v871
          %881 = vmatpush.bf16.msra.mxu0 %v870
          %882 = vmatpush.bf16.msra.mxu0 %v869
          %883 = vmatpush.bf16.msra.mxu0 %v868
          %884 = vmatmul.bf16.gmra.mxu0 %v816
          %v885 = vpop.f32.mrf.mxu0
          %v886 = vadd.f32 %v850, %v885
          %v887 = vpop.f32.mrf.mxu0
          %v888 = vadd.f32 %v850, %v887
          %889 = vmatmul.bf16.gmra.mxu0 %v819
          %v890 = vpop.f32.mrf.mxu0
          %v891 = vadd.f32 %v850, %v890
          %v892 = vpop.f32.mrf.mxu0
          %v893 = vadd.f32 %v850, %v892
          %894 = vdwg.mxu0
          %895 = vxpose.xlu0.b32.start [1/16] %v831, 128
          %896 = vxpose.xlu0.b32.cont [2/16] %v833, 128
          %897 = vxpose.xlu0.b32.cont [3/16] %v836, 128
          %898 = vxpose.xlu0.b32.cont [4/16] %v838, 128
          %899 = vxpose.xlu0.b32.cont [5/16] 0.0, 128
          %900 = vxpose.xlu0.b32.cont [6/16] 0.0, 128
          %901 = vxpose.xlu0.b32.cont [7/16] 0.0, 128
          %902 = vxpose.xlu0.b32.cont [8/16] 0.0, 128
          %903 = vxpose.xlu0.b32.cont [9/16] 0.0, 128
          %904 = vxpose.xlu0.b32.cont [10/16] 0.0, 128
          %905 = vxpose.xlu0.b32.cont [11/16] 0.0, 128
          %906 = vxpose.xlu0.b32.cont [12/16] 0.0, 128
          %907 = vxpose.xlu0.b32.cont [13/16] 0.0, 128
          %908 = vxpose.xlu0.b32.cont [14/16] 0.0, 128
          %909 = vxpose.xlu0.b32.cont [15/16] 0.0, 128
          %910 = vxpose.xlu0.b32.end [16/16] 0.0, 128
          %v911 = vpop.trf.xlu0
          %v912 = vpop.trf.xlu0
          %v913 = vpop.trf.xlu0
          %v914 = vpop.trf.xlu0
          %v915 = vpop.trf.xlu0
          %v916 = vpop.trf.xlu0
          %v917 = vpop.trf.xlu0
          %v918 = vpop.trf.xlu0
          %v919 = vpop.trf.xlu0
          %v920 = vpop.trf.xlu0
          %v921 = vpop.trf.xlu0
          %v922 = vpop.trf.xlu0
          %v923 = vpop.trf.xlu0
          %v924 = vpop.trf.xlu0
          %v925 = vpop.trf.xlu0
          %v926 = vpop.trf.xlu0
          %v927 = vpack.c.bf16 %v911, %v911
          %v928 = vpack.c.bf16 %v912, %v912
          %v929 = vpack.c.bf16 %v913, %v913
          %v930 = vpack.c.bf16 %v914, %v914
          %v931 = vpack.c.bf16 %v915, %v915
          %v932 = vpack.c.bf16 %v916, %v916
          %v933 = vpack.c.bf16 %v917, %v917
          %v934 = vpack.c.bf16 %v918, %v918
          %vm935 = vcmask 257024
          %936 = vst.msk [vmem:[#allocation3] sm:$0xf] %vm935, %v927
          %937 = vst.msk [vmem:[#allocation3 + $0x4] sm:$0xf] %vm935, %v928
          %938 = vst.msk [vmem:[#allocation3 + $0x8] sm:$0xf] %vm935, %v929
          %939 = vst.msk [vmem:[#allocation3 + $0xc] sm:$0xf] %vm935, %v930
          %940 = vst.msk [vmem:[#allocation3 + $0x10] sm:$0xf] %vm935, %v931
          %941 = vst.msk [vmem:[#allocation3 + $0x14] sm:$0xf] %vm935, %v932
          %942 = vst.msk [vmem:[#allocation3 + $0x18] sm:$0xf] %vm935, %v933
          %943 = vst.msk [vmem:[#allocation3 + $0x1c] sm:$0xf] %vm935, %v934
          %v944 = vpack.c.bf16 %v886, %v886
          %v945 = vpack.c.bf16 %v888, %v888
          %v946 = vpack.c.bf16 %v891, %v891
          %v947 = vpack.c.bf16 %v893, %v893
          %vm948 = vcmask 125952
          %949 = vst.msk [vmem:[#allocation4] sm:$0xf] %vm948, %v944
          %950 = vst.msk [vmem:[#allocation4 + $0x4] sm:$0xf] %vm948, %v945
          %951 = vst.msk [vmem:[#allocation4 + $0x8] sm:$0xf] %vm948, %v946
          %952 = vst.msk [vmem:[#allocation4 + $0xc] sm:$0xf] %vm948, %v947
          %957 = vrot.lane.b32.xlu0 %v944, 112
          %v958 = vpop.permute.xlu0 %957
          %959 = vrot.lane.b32.xlu0 %v945, 112
          %v960 = vpop.permute.xlu0 %959
          %961 = vrot.lane.b32.xlu0 %v946, 112
          %v962 = vpop.permute.xlu0 %961
          %963 = vrot.lane.b32.xlu0 %v947, 112
          %v964 = vpop.permute.xlu0 %963
          %s969 = scalar_lea.vmem [#allocation4], 16
          %970 = vst.msk [vmem:[%s969] sm:$0xf] %vm948, %v958
          %971 = vst.msk [vmem:[%s969 + $0x4] sm:$0xf] %vm948, %v960
          %972 = vst.msk [vmem:[%s969 + $0x8] sm:$0xf] %vm948, %v962
          %973 = vst.msk [vmem:[%s969 + $0xc] sm:$0xf] %vm948, %v964
          %974 = vrot.lane.b32.xlu0 %v944, 96
          %v975 = vpop.permute.xlu0 %974
          %976 = vrot.lane.b32.xlu0 %v945, 96
          %v977 = vpop.permute.xlu0 %976
          %978 = vrot.lane.b32.xlu0 %v946, 96
          %v979 = vpop.permute.xlu0 %978
          %980 = vrot.lane.b32.xlu0 %v947, 96
          %v981 = vpop.permute.xlu0 %980
          %s986 = scalar_lea.vmem [#allocation4], 32
          %987 = vst.msk [vmem:[%s986] sm:$0xf] %vm948, %v975
          %988 = vst.msk [vmem:[%s986 + $0x4] sm:$0xf] %vm948, %v977
          %989 = vst.msk [vmem:[%s986 + $0x8] sm:$0xf] %vm948, %v979
          %990 = vst.msk [vmem:[%s986 + $0xc] sm:$0xf] %vm948, %v981
          %991 = vrot.lane.b32.xlu0 %v944, 80
          %v992 = vpop.permute.xlu0 %991
          %993 = vrot.lane.b32.xlu0 %v945, 80
          %v994 = vpop.permute.xlu0 %993
          %995 = vrot.lane.b32.xlu0 %v946, 80
          %v996 = vpop.permute.xlu0 %995
          %997 = vrot.lane.b32.xlu0 %v947, 80
          %v998 = vpop.permute.xlu0 %997
          %s1003 = scalar_lea.vmem [#allocation4], 48
          %1004 = vst.msk [vmem:[%s1003] sm:$0xf] %vm948, %v992
          %1005 = vst.msk [vmem:[%s1003 + $0x4] sm:$0xf] %vm948, %v994
          %1006 = vst.msk [vmem:[%s1003 + $0x8] sm:$0xf] %vm948, %v996
          %1007 = vst.msk [vmem:[%s1003 + $0xc] sm:$0xf] %vm948, %v998
        $region112: #{tpu_custom_call.1} parent=87 // pred_fallthru
          _
        %s1008 = smul.u32 %s39, 16
        %s1009 = scalar_lea.vmem %s637, %s1008
        %v1010 = vld [vmem:[%s1009] sm:$0xff]
        %v1011 = vld [vmem:[%s1009 + $0x8] sm:$0xff]
        %s1012 = sshra.s32 %s1008, 3
        %s1013 = sand.u32 %s1008, 7
        %s1014 = smul.addr %s1012, 4
        %s1015 = scalar_lea.vmem [#allocation2], %s1014
        %v1016 = vld [vmem:[%s1015] sm:$0xf]
        %v1017 = vld [vmem:[%s1015 + $0x4] sm:$0xf]
        %v1018 = vld [vmem:[%s3] sm:$0xf]
        %v1019 = vld [vmem:[%s3 + $0x4] sm:$0xf]
        %v1020 = vld [vmem:[%s3 + $0x8] sm:$0xf]
        %v1021 = vld [vmem:[%s3 + $0xc] sm:$0xf]
        %v1022 = vld [vmem:[%s3 + $0x10] sm:$0xf]
        %v1023 = vld [vmem:[%s3 + $0x14] sm:$0xf]
        %v1024 = vld [vmem:[%s3 + $0x18] sm:$0xf]
        %v1025 = vld [vmem:[%s3 + $0x1c] sm:$0xf]
        %v1026 = vld [vmem:[#allocation10] sm:$0x1]
        %v1028 = vperm.slane %v1026, 0
        %v1032 = vunpack.c.l.b16 %v1016
        %v1033 = vunpack.c.l.b16 %v1017
        %v1034 = vpack.c.b16 %v1033, %v1032
        %v1043 = vunpack.c.l.b16 %v1018
        %v1044 = vunpack.c.l.b16 %v1019
        %v1045 = vunpack.c.l.b16 %v1020
        %v1046 = vunpack.c.l.b16 %v1021
        %v1047 = vunpack.c.l.b16 %v1022
        %v1048 = vunpack.c.l.b16 %v1023
        %v1049 = vunpack.c.l.b16 %v1024
        %v1050 = vunpack.c.l.b16 %v1025
        %v1051 = vpack.c.b16 %v1044, %v1043
        %v1052 = vpack.c.b16 %v1046, %v1045
        %v1053 = vpack.c.b16 %v1048, %v1047
        %v1054 = vpack.c.b16 %v1050, %v1049
        %vm1059 = vcmask 523264
        %v1061 = vsel %vm1059, %v1034, 0
        %1063 = vmatpush.bf16.msra.mxu0 0
        %1064 = vmatpush.bf16.msra.mxu0 0
        %1065 = vmatpush.bf16.msra.mxu0 0
        %1066 = vmatpush.bf16.msra.mxu0 0
        %1067 = vmatpush.bf16.msra.mxu0 %v1054
        %1068 = vmatpush.bf16.msra.mxu0 %v1053
        %1069 = vmatpush.bf16.msra.mxu0 %v1052
        %1070 = vmatpush.bf16.msra.mxu0 %v1051
        %1071 = vmatmul.bf16.gmra.mxu0 %v1061
        %v1072 = vpop.f32.mrf.mxu0
        %v1073 = vadd.f32 %v1028, %v1072
        %v1074 = vpop.f32.mrf.mxu0
        %v1075 = vadd.f32 %v1028, %v1074
        %1076 = vdwg.mxu0
        %v1077 = vpack.c.bf16 %v1073, %v1073
        %v1078 = vpack.c.bf16 %v1075, %v1075
        %v1079 = vld [vmem:[#allocation3] sm:$0xf]
        %v1080 = vld [vmem:[#allocation3 + $0x4] sm:$0xf]
        %v1083 = vunpack.c.l.b16 %v1077
        %v1084 = vunpack.c.l.b16 %v1078
        %v1085 = vpack.c.b16 %v1084, %v1083
        %v1088 = vunpack.c.l.b16 %v1079
        %v1089 = vunpack.c.l.b16 %v1080
        %v1090 = vpack.c.b16 %v1089, %v1088
        %vm1092 = vcmask 130048
        %v1094 = vsel %vm1092, %v1085, 0
        %1096 = vmatpush.bf16.msra.mxu0 0
        %1097 = vmatpush.bf16.msra.mxu0 0
        %1098 = vmatpush.bf16.msra.mxu0 0
        %1099 = vmatpush.bf16.msra.mxu0 0
        %1100 = vmatpush.bf16.msra.mxu0 0
        %1101 = vmatpush.bf16.msra.mxu0 0
        %1102 = vmatpush.bf16.msra.mxu0 0
        %1103 = vmatpush.bf16.msra.mxu0 %v1090
        %1104 = vmatmul.bf16.gmra.mxu0 %v1094
        %v1105 = vpop.f32.mrf.mxu0
        %v1106 = vadd.f32 0.0, %v1105
        %v1107 = vpop.f32.mrf.mxu0
        %v1108 = vadd.f32 0.0, %v1107
        %1109 = vdwg.mxu0
        %vm1110 = vcmask 261120
        %v1111 = vsel %vm1110, %v1106, -inf
        %1112 = vmax.xlane.f32.xlu0 %v1111
        %v1113 = vpop.xlane.xlu0 %1112
        %v1114 = vsel %vm1110, %v1108, -inf
        %1115 = vmax.xlane.f32.xlu0 %v1114
        %v1116 = vpop.xlane.xlu0 %1115
        %v1117 = vsub.f32 %v1106, %v1113
        %v1118 = vsub.f32 %v1108, %v1116
        %v1119 = vmul.f32 %v1117, 1.442695
        %v1120 = vpow.pop %v1119
        %v1121 = vmul.f32 %v1118, 1.442695
        %v1122 = vpow.pop %v1121
        %v1123 = vsel %vm1110, %v1120, 0.0
        %1124 = vadd.xlane.f32.xlu0 %v1123
        %v1125 = vpop.xlane.xlu0 %1124
        %v1126 = vsel %vm1110, %v1122, 0.0
        %1127 = vadd.xlane.f32.xlu0 %v1126
        %v1128 = vpop.xlane.xlu0 %1127
        %v1129 = vrcp.pop %v1125
        %v1130 = vrcp.pop %v1128
        %v1131 = vpack.c.bf16 %v1122, %v1120
        %v1132 = vld [vmem:[#allocation4] sm:$0xf]
        %v1133 = vld [vmem:[#allocation4 + $0x4] sm:$0xf]
        %v1134 = vld [vmem:[#allocation4 + $0x8] sm:$0xf]
        %v1135 = vld [vmem:[#allocation4 + $0xc] sm:$0xf]
        %v1140 = vunpack.c.l.b16 %v1132
        %v1141 = vunpack.c.l.b16 %v1133
        %v1142 = vunpack.c.l.b16 %v1134
        %v1143 = vunpack.c.l.b16 %v1135
        %v1144 = vpack.c.b16 %v1141, %v1140
        %v1145 = vpack.c.b16 %v1143, %v1142
        %v1149 = vsel %vm1110, %v1131, 0
        %1151 = vmatpush.bf16.msra.mxu0 0
        %1152 = vmatpush.bf16.msra.mxu0 0
        %1153 = vmatpush.bf16.msra.mxu0 0
        %1154 = vmatpush.bf16.msra.mxu0 0
        %1155 = vmatpush.bf16.msra.mxu0 0
        %1156 = vmatpush.bf16.msra.mxu0 0
        %1157 = vmatpush.bf16.msra.mxu0 %v1145
        %1158 = vmatpush.bf16.msra.mxu0 %v1144
        %1159 = vmatmul.bf16.gmra.mxu0 %v1149
        %v1160 = vpop.f32.mrf.mxu0
        %v1161 = vadd.f32 0.0, %v1160
        %v1162 = vpop.f32.mrf.mxu0
        %v1163 = vadd.f32 0.0, %v1162
        %1164 = vdwg.mxu0
        %v1165 = vmul.f32 %v1161, %v1129
        %v1166 = vmul.f32 %v1163, %v1130
        %v1167 = vpack.c.bf16 %v1165, %v1165
        %v1168 = vpack.c.bf16 %v1166, %v1166
        %v1169 = vld [vmem:[#allocation3 + $0x8] sm:$0xf]
        %v1170 = vld [vmem:[#allocation3 + $0xc] sm:$0xf]
        %1171 = vrot.lane.b32.xlu0 %v1085, 112
        %v1172 = vpop.permute.xlu0 %1171
        %v1175 = vunpack.c.l.b16 %v1169
        %v1176 = vunpack.c.l.b16 %v1170
        %v1177 = vpack.c.b16 %v1176, %v1175
        %v1180 = vsel %vm1092, %v1172, 0
        %1182 = vmatpush.bf16.msra.mxu0 0
        %1183 = vmatpush.bf16.msra.mxu0 0
        %1184 = vmatpush.bf16.msra.mxu0 0
        %1185 = vmatpush.bf16.msra.mxu0 0
        %1186 = vmatpush.bf16.msra.mxu0 0
        %1187 = vmatpush.bf16.msra.mxu0 0
        %1188 = vmatpush.bf16.msra.mxu0 0
        %1189 = vmatpush.bf16.msra.mxu0 %v1177
        %1190 = vmatmul.bf16.gmra.mxu0 %v1180
        %v1191 = vpop.f32.mrf.mxu0
        %v1192 = vadd.f32 0.0, %v1191
        %v1193 = vpop.f32.mrf.mxu0
        %v1194 = vadd.f32 0.0, %v1193
        %1195 = vdwg.mxu0
        %v1196 = vsel %vm1110, %v1192, -inf
        %1197 = vmax.xlane.f32.xlu0 %v1196
        %v1198 = vpop.xlane.xlu0 %1197
        %v1199 = vsel %vm1110, %v1194, -inf
        %1200 = vmax.xlane.f32.xlu0 %v1199
        %v1201 = vpop.xlane.xlu0 %1200
        %v1202 = vsub.f32 %v1192, %v1198
        %v1203 = vsub.f32 %v1194, %v1201
        %v1204 = vmul.f32 %v1202, 1.442695
        %v1205 = vpow.pop %v1204
        %v1206 = vmul.f32 %v1203, 1.442695
        %v1207 = vpow.pop %v1206
        %v1208 = vsel %vm1110, %v1205, 0.0
        %1209 = vadd.xlane.f32.xlu0 %v1208
        %v1210 = vpop.xlane.xlu0 %1209
        %v1211 = vsel %vm1110, %v1207, 0.0
        %1212 = vadd.xlane.f32.xlu0 %v1211
        %v1213 = vpop.xlane.xlu0 %1212
        %v1214 = vrcp.pop %v1210
        %v1215 = vrcp.pop %v1213
        %v1216 = vpack.c.bf16 %v1207, %v1205
        %s1217 = scalar_lea.vmem [#allocation4], 16
        %v1218 = vld [vmem:[%s1217] sm:$0xf]
        %v1219 = vld [vmem:[%s1217 + $0x4] sm:$0xf]
        %v1220 = vld [vmem:[%s1217 + $0x8] sm:$0xf]
        %v1221 = vld [vmem:[%s1217 + $0xc] sm:$0xf]
        %v1226 = vunpack.c.l.b16 %v1218
        %v1227 = vunpack.c.l.b16 %v1219
        %v1228 = vunpack.c.l.b16 %v1220
        %v1229 = vunpack.c.l.b16 %v1221
        %v1230 = vpack.c.b16 %v1227, %v1226
        %v1231 = vpack.c.b16 %v1229, %v1228
        %v1235 = vsel %vm1110, %v1216, 0
        %1237 = vmatpush.bf16.msra.mxu0 0
        %1238 = vmatpush.bf16.msra.mxu0 0
        %1239 = vmatpush.bf16.msra.mxu0 0
        %1240 = vmatpush.bf16.msra.mxu0 0
        %1241 = vmatpush.bf16.msra.mxu0 0
        %1242 = vmatpush.bf16.msra.mxu0 0
        %1243 = vmatpush.bf16.msra.mxu0 %v1231
        %1244 = vmatpush.bf16.msra.mxu0 %v1230
        %1245 = vmatmul.bf16.gmra.mxu0 %v1235
        %v1246 = vpop.f32.mrf.mxu0
        %v1247 = vadd.f32 0.0, %v1246
        %v1248 = vpop.f32.mrf.mxu0
        %v1249 = vadd.f32 0.0, %v1248
        %1250 = vdwg.mxu0
        %v1251 = vmul.f32 %v1247, %v1214
        %v1252 = vmul.f32 %v1249, %v1215
        %v1253 = vpack.c.bf16 %v1251, %v1251
        %v1254 = vpack.c.bf16 %v1252, %v1252
        %v1255 = vld [vmem:[#allocation3 + $0x10] sm:$0xf]
        %v1256 = vld [vmem:[#allocation3 + $0x14] sm:$0xf]
        %1257 = vrot.lane.b32.xlu0 %v1085, 96
        %v1258 = vpop.permute.xlu0 %1257
        %v1261 = vunpack.c.l.b16 %v1255
        %v1262 = vunpack.c.l.b16 %v1256
        %v1263 = vpack.c.b16 %v1262, %v1261
        %v1266 = vsel %vm1092, %v1258, 0
        %1268 = vmatpush.bf16.msra.mxu0 0
        %1269 = vmatpush.bf16.msra.mxu0 0
        %1270 = vmatpush.bf16.msra.mxu0 0
        %1271 = vmatpush.bf16.msra.mxu0 0
        %1272 = vmatpush.bf16.msra.mxu0 0
        %1273 = vmatpush.bf16.msra.mxu0 0
        %1274 = vmatpush.bf16.msra.mxu0 0
        %1275 = vmatpush.bf16.msra.mxu0 %v1263
        %1276 = vmatmul.bf16.gmra.mxu0 %v1266
        %v1277 = vpop.f32.mrf.mxu0
        %v1278 = vadd.f32 0.0, %v1277
        %v1279 = vpop.f32.mrf.mxu0
        %v1280 = vadd.f32 0.0, %v1279
        %1281 = vdwg.mxu0
        %v1282 = vsel %vm1110, %v1278, -inf
        %1283 = vmax.xlane.f32.xlu0 %v1282
        %v1284 = vpop.xlane.xlu0 %1283
        %v1285 = vsel %vm1110, %v1280, -inf
        %1286 = vmax.xlane.f32.xlu0 %v1285
        %v1287 = vpop.xlane.xlu0 %1286
        %v1288 = vsub.f32 %v1278, %v1284
        %v1289 = vsub.f32 %v1280, %v1287
        %v1290 = vmul.f32 %v1288, 1.442695
        %v1291 = vpow.pop %v1290
        %v1292 = vmul.f32 %v1289, 1.442695
        %v1293 = vpow.pop %v1292
        %v1294 = vsel %vm1110, %v1291, 0.0
        %1295 = vadd.xlane.f32.xlu0 %v1294
        %v1296 = vpop.xlane.xlu0 %1295
        %v1297 = vsel %vm1110, %v1293, 0.0
        %1298 = vadd.xlane.f32.xlu0 %v1297
        %v1299 = vpop.xlane.xlu0 %1298
        %v1300 = vrcp.pop %v1296
        %v1301 = vrcp.pop %v1299
        %v1302 = vpack.c.bf16 %v1293, %v1291
        %s1303 = scalar_lea.vmem [#allocation4], 32
        %v1304 = vld [vmem:[%s1303] sm:$0xf]
        %v1305 = vld [vmem:[%s1303 + $0x4] sm:$0xf]
        %v1306 = vld [vmem:[%s1303 + $0x8] sm:$0xf]
        %v1307 = vld [vmem:[%s1303 + $0xc] sm:$0xf]
        %v1312 = vunpack.c.l.b16 %v1304
        %v1313 = vunpack.c.l.b16 %v1305
        %v1314 = vunpack.c.l.b16 %v1306
        %v1315 = vunpack.c.l.b16 %v1307
        %v1316 = vpack.c.b16 %v1313, %v1312
        %v1317 = vpack.c.b16 %v1315, %v1314
        %v1321 = vsel %vm1110, %v1302, 0
        %1323 = vmatpush.bf16.msra.mxu0 0
        %1324 = vmatpush.bf16.msra.mxu0 0
        %1325 = vmatpush.bf16.msra.mxu0 0
        %1326 = vmatpush.bf16.msra.mxu0 0
        %1327 = vmatpush.bf16.msra.mxu0 0
        %1328 = vmatpush.bf16.msra.mxu0 0
        %1329 = vmatpush.bf16.msra.mxu0 %v1317
        %1330 = vmatpush.bf16.msra.mxu0 %v1316
        %1331 = vmatmul.bf16.gmra.mxu0 %v1321
        %v1332 = vpop.f32.mrf.mxu0
        %v1333 = vadd.f32 0.0, %v1332
        %v1334 = vpop.f32.mrf.mxu0
        %v1335 = vadd.f32 0.0, %v1334
        %1336 = vdwg.mxu0
        %v1337 = vmul.f32 %v1333, %v1300
        %v1338 = vmul.f32 %v1335, %v1301
        %v1339 = vpack.c.bf16 %v1337, %v1337
        %v1340 = vpack.c.bf16 %v1338, %v1338
        %v1341 = vld [vmem:[#allocation3 + $0x18] sm:$0xf]
        %v1342 = vld [vmem:[#allocation3 + $0x1c] sm:$0xf]
        %1343 = vrot.lane.b32.xlu0 %v1085, 80
        %v1344 = vpop.permute.xlu0 %1343
        %v1347 = vunpack.c.l.b16 %v1341
        %v1348 = vunpack.c.l.b16 %v1342
        %v1349 = vpack.c.b16 %v1348, %v1347
        %v1352 = vsel %vm1092, %v1344, 0
        %1354 = vmatpush.bf16.msra.mxu0 0
        %1355 = vmatpush.bf16.msra.mxu0 0
        %1356 = vmatpush.bf16.msra.mxu0 0
        %1357 = vmatpush.bf16.msra.mxu0 0
        %1358 = vmatpush.bf16.msra.mxu0 0
        %1359 = vmatpush.bf16.msra.mxu0 0
        %1360 = vmatpush.bf16.msra.mxu0 0
        %1361 = vmatpush.bf16.msra.mxu0 %v1349
        %1362 = vmatmul.bf16.gmra.mxu0 %v1352
        %v1363 = vpop.f32.mrf.mxu0
        %v1364 = vadd.f32 0.0, %v1363
        %v1365 = vpop.f32.mrf.mxu0
        %v1366 = vadd.f32 0.0, %v1365
        %1367 = vdwg.mxu0
        %v1368 = vsel %vm1110, %v1364, -inf
        %1369 = vmax.xlane.f32.xlu0 %v1368
        %v1370 = vpop.xlane.xlu0 %1369
        %v1371 = vsel %vm1110, %v1366, -inf
        %1372 = vmax.xlane.f32.xlu0 %v1371
        %v1373 = vpop.xlane.xlu0 %1372
        %v1374 = vsub.f32 %v1364, %v1370
        %v1375 = vsub.f32 %v1366, %v1373
        %v1376 = vmul.f32 %v1374, 1.442695
        %v1377 = vpow.pop %v1376
        %v1378 = vmul.f32 %v1375, 1.442695
        %v1379 = vpow.pop %v1378
        %v1380 = vsel %vm1110, %v1377, 0.0
        %1381 = vadd.xlane.f32.xlu0 %v1380
        %v1382 = vpop.xlane.xlu0 %1381
        %v1383 = vsel %vm1110, %v1379, 0.0
        %1384 = vadd.xlane.f32.xlu0 %v1383
        %v1385 = vpop.xlane.xlu0 %1384
        %v1386 = vrcp.pop %v1382
        %v1387 = vrcp.pop %v1385
        %v1388 = vpack.c.bf16 %v1379, %v1377
        %s1389 = scalar_lea.vmem [#allocation4], 48
        %v1390 = vld [vmem:[%s1389] sm:$0xf]
        %v1391 = vld [vmem:[%s1389 + $0x4] sm:$0xf]
        %v1392 = vld [vmem:[%s1389 + $0x8] sm:$0xf]
        %v1393 = vld [vmem:[%s1389 + $0xc] sm:$0xf]
        %v1398 = vunpack.c.l.b16 %v1390
        %v1399 = vunpack.c.l.b16 %v1391
        %v1400 = vunpack.c.l.b16 %v1392
        %v1401 = vunpack.c.l.b16 %v1393
        %v1402 = vpack.c.b16 %v1399, %v1398
        %v1403 = vpack.c.b16 %v1401, %v1400
        %v1407 = vsel %vm1110, %v1388, 0
        %1409 = vmatpush.bf16.msra.mxu0 0
        %1410 = vmatpush.bf16.msra.mxu0 0
        %1411 = vmatpush.bf16.msra.mxu0 0
        %1412 = vmatpush.bf16.msra.mxu0 0
        %1413 = vmatpush.bf16.msra.mxu0 0
        %1414 = vmatpush.bf16.msra.mxu0 0
        %1415 = vmatpush.bf16.msra.mxu0 %v1403
        %1416 = vmatpush.bf16.msra.mxu0 %v1402
        %1417 = vmatmul.bf16.gmra.mxu0 %v1407
        %v1418 = vpop.f32.mrf.mxu0
        %v1419 = vadd.f32 0.0, %v1418
        %v1420 = vpop.f32.mrf.mxu0
        %v1421 = vadd.f32 0.0, %v1420
        %1422 = vdwg.mxu0
        %v1423 = vmul.f32 %v1419, %v1386
        %v1424 = vmul.f32 %v1421, %v1387
        %v1425 = vpack.c.bf16 %v1423, %v1423
        %v1426 = vpack.c.bf16 %v1424, %v1424
        %v1429 = vunpack.c.l.b16 %v1167
        %v1430 = vunpack.c.l.b16 %v1168
        %v1431 = vpack.c.b16 %v1430, %v1429
        %v1434 = vunpack.c.l.b16 %v1253
        %v1435 = vunpack.c.l.b16 %v1254
        %v1436 = vpack.c.b16 %v1435, %v1434
        %1437 = vrot.lane.b32.xlu0 %v1436, 16
        %v1438 = vpop.permute.xlu0 %1437
        %v1441 = vunpack.c.l.b16 %v1339
        %v1442 = vunpack.c.l.b16 %v1340
        %v1443 = vpack.c.b16 %v1442, %v1441
        %1444 = vrot.lane.b32.xlu0 %v1443, 32
        %v1445 = vpop.permute.xlu0 %1444
        %v1448 = vunpack.c.l.b16 %v1425
        %v1449 = vunpack.c.l.b16 %v1426
        %v1450 = vpack.c.b16 %v1449, %v1448
        %1451 = vrot.lane.b32.xlu0 %v1450, 48
        %v1452 = vpop.permute.xlu0 %1451
        %v1455 = vsel %vm1092, %v1431, %v1438
        %v1457 = vsel %vm1110, %v1455, %v1445
        %vm1458 = vcmask 392192
        %v1460 = vsel %vm1458, %v1457, %v1452
        %v1461 = vld [vmem:[#allocation13] sm:$0xf]
        %v1462 = vld [vmem:[#allocation13 + $0x4] sm:$0xf]
        %v1463 = vld [vmem:[#allocation13 + $0x8] sm:$0xf]
        %v1464 = vld [vmem:[#allocation13 + $0xc] sm:$0xf]
        %v1465 = vld [vmem:[#allocation13 + $0x10] sm:$0xf]
        %v1466 = vld [vmem:[#allocation13 + $0x14] sm:$0xf]
        %v1467 = vld [vmem:[#allocation13 + $0x18] sm:$0xf]
        %v1468 = vld [vmem:[#allocation13 + $0x1c] sm:$0xf]
        %v1469 = vld [vmem:[%s10] sm:$0x1]
        %v1471 = vperm.slane %v1469, 0
        %v1481 = vunpack.c.l.b16 %v1461
        %v1482 = vunpack.c.l.b16 %v1462
        %v1483 = vunpack.c.l.b16 %v1463
        %v1484 = vunpack.c.l.b16 %v1464
        %v1485 = vunpack.c.l.b16 %v1465
        %v1486 = vunpack.c.l.b16 %v1466
        %v1487 = vunpack.c.l.b16 %v1467
        %v1488 = vunpack.c.l.b16 %v1468
        %v1489 = vpack.c.b16 %v1482, %v1481
        %v1490 = vpack.c.b16 %v1484, %v1483
        %v1491 = vpack.c.b16 %v1486, %v1485
        %v1492 = vpack.c.b16 %v1488, %v1487
        %v1497 = vsel %vm1059, %v1460, 0
        %1499 = vmatpush.bf16.msra.mxu0 0
        %1500 = vmatpush.bf16.msra.mxu0 0
        %1501 = vmatpush.bf16.msra.mxu0 0
        %1502 = vmatpush.bf16.msra.mxu0 0
        %1503 = vmatpush.bf16.msra.mxu0 %v1492
        %1504 = vmatpush.bf16.msra.mxu0 %v1491
        %1505 = vmatpush.bf16.msra.mxu0 %v1490
        %1506 = vmatpush.bf16.msra.mxu0 %v1489
        %1507 = vmatmul.bf16.gmra.mxu0 %v1497
        %v1508 = vpop.f32.mrf.mxu0
        %v1509 = vadd.f32 %v1471, %v1508
        %v1510 = vpop.f32.mrf.mxu0
        %v1511 = vadd.f32 %v1471, %v1510
        %1512 = vdwg.mxu0
        %v1513 = vadd.f32 %v1010, %v1509
        %v1514 = vadd.f32 %v1011, %v1511
        %v1515 = vld [vmem:[%s11] sm:$0x1]
        %v1516 = vld [vmem:[%s12] sm:$0x1]
        %v1517 = vsel %vm1059, %v1513, 0.0
        %1518 = vadd.xlane.f32.xlu0 %v1517
        %v1519 = vpop.xlane.xlu0 %1518
        %v1520 = vsel %vm1059, %v1514, 0.0
        %1521 = vadd.xlane.f32.xlu0 %v1520
        %v1522 = vpop.xlane.xlu0 %1521
        %v1523 = vrcp.pop 64.0
        %v1524 = vmul.f32 64.0, %v1523
        %v1525 = vsub.f32 1.0, %v1524
        %v1526 = vmul.f32 %v1523, %v1525
        %v1527 = vadd.f32 %v1523, %v1526
        %vm1528 = vweird.f32 %v1523
        %v1529 = vsel %vm1528, %v1523, %v1527
        %v1530 = vmul.f32 %v1519, %v1529
        %v1531 = vmul.f32 %v1522, %v1529
        %v1532 = vsub.f32 %v1513, %v1530
        %v1533 = vsub.f32 %v1514, %v1531
        %v1534 = vmul.f32 %v1532, %v1532
        %v1535 = vmul.f32 %v1533, %v1533
        %v1536 = vsel %vm1059, %v1534, 0.0
        %1537 = vadd.xlane.f32.xlu0 %v1536
        %v1538 = vpop.xlane.xlu0 %1537
        %v1539 = vsel %vm1059, %v1535, 0.0
        %1540 = vadd.xlane.f32.xlu0 %v1539
        %v1541 = vpop.xlane.xlu0 %1540
        %v1542 = vmul.f32 %v1538, %v1529
        %v1543 = vmul.f32 %v1541, %v1529
        %v1544 = vadd.f32 %v1542, 1e-05
        %v1545 = vadd.f32 %v1543, 1e-05
        %v1546 = vrsqrt.pop %v1544
        %v1547 = vmul.f32 %v1546, %v1544
        %v1548 = vmul.f32 %v1547, %v1546
        %v1549 = vmul.f32 0.5, %v1548
        %v1550 = vsub.f32 1.5, %v1549
        %v1551 = vmul.f32 %v1546, %v1550
        %vm1552 = vweird.f32 %v1544
        %vm1553 = vweird.f32 %v1546
        %vm1554 = vmor %vm1552, %vm1553
        %v1555 = vsel %vm1554, %v1546, %v1551
        %v1556 = vrsqrt.pop %v1545
        %v1557 = vmul.f32 %v1556, %v1545
        %v1558 = vmul.f32 %v1557, %v1556
        %v1559 = vmul.f32 0.5, %v1558
        %v1560 = vsub.f32 1.5, %v1559
        %v1561 = vmul.f32 %v1556, %v1560
        %vm1562 = vweird.f32 %v1545
        %vm1563 = vweird.f32 %v1556
        %vm1564 = vmor %vm1562, %vm1563
        %v1565 = vsel %vm1564, %v1556, %v1561
        %v1566 = vmul.f32 %v1532, %v1555
        %v1567 = vmul.f32 %v1533, %v1565
        %v1569 = vperm.slane %v1515, 0
        %v1571 = vmul.f32 %v1566, %v1569
        %v1572 = vmul.f32 %v1567, %v1569
        %v1574 = vperm.slane %v1516, 0
        %v1576 = vadd.f32 %v1571, %v1574
        %v1577 = vadd.f32 %v1572, %v1574
        %v1578 = vpack.c.bf16 %v1577, %v1576
        %v1579 = vld [vmem:[%s13] sm:$0xff]
        %v1580 = vld [vmem:[%s13 + $0x8] sm:$0xff]
        %v1581 = vld [vmem:[%s13 + $0x10] sm:$0xff]
        %v1582 = vld [vmem:[%s13 + $0x18] sm:$0xff]
        %v1583 = vld [vmem:[%s13 + $0x20] sm:$0xff]
        %v1584 = vld [vmem:[%s13 + $0x28] sm:$0xff]
        %v1585 = vld [vmem:[%s13 + $0x30] sm:$0xff]
        %v1586 = vld [vmem:[%s13 + $0x38] sm:$0xff]
        %v1587 = vld [vmem:[%s14] sm:$0x3]
        %v1589 = vperm.slane %v1587, 0
        %v1590 = vperm.slane %v1587, 1
        %v1601 = vunpack.c.l.b16 %v1579
        %v1602 = vunpack.c.h.b16 %v1579
        %v1603 = vunpack.c.l.b16 %v1580
        %v1604 = vunpack.c.h.b16 %v1580
        %v1605 = vunpack.c.l.b16 %v1581
        %v1606 = vunpack.c.h.b16 %v1581
        %v1607 = vunpack.c.l.b16 %v1582
        %v1608 = vunpack.c.h.b16 %v1582
        %v1609 = vunpack.c.l.b16 %v1583
        %v1610 = vunpack.c.h.b16 %v1583
        %v1611 = vunpack.c.l.b16 %v1584
        %v1612 = vunpack.c.h.b16 %v1584
        %v1613 = vunpack.c.l.b16 %v1585
        %v1614 = vunpack.c.h.b16 %v1585
        %v1615 = vunpack.c.l.b16 %v1586
        %v1616 = vunpack.c.h.b16 %v1586
        %v1617 = vpack.c.b16 %v1603, %v1601
        %v1618 = vpack.c.b16 %v1604, %v1602
        %v1619 = vpack.c.b16 %v1607, %v1605
        %v1620 = vpack.c.b16 %v1608, %v1606
        %v1621 = vpack.c.b16 %v1611, %v1609
        %v1622 = vpack.c.b16 %v1612, %v1610
        %v1623 = vpack.c.b16 %v1615, %v1613
        %v1624 = vpack.c.b16 %v1616, %v1614
        %v1634 = vsel %vm1059, %v1578, 0
        %1636 = vmatpush.bf16.msra.mxu0 0
        %1637 = vmatpush.bf16.msra.mxu0 0
        %1638 = vmatpush.bf16.msra.mxu0 0
        %1639 = vmatpush.bf16.msra.mxu0 0
        %1640 = vmatpush.bf16.msra.mxu0 %v1623
        %1641 = vmatpush.bf16.msra.mxu0 %v1621
        %1642 = vmatpush.bf16.msra.mxu0 %v1619
        %1643 = vmatpush.bf16.msra.mxu0 %v1617
        %1644 = vmatmul.bf16.gmra.mxu0 %v1634
        %v1645 = vpop.f32.mrf.mxu0
        %v1646 = vadd.f32 %v1589, %v1645
        %v1647 = vpop.f32.mrf.mxu0
        %v1648 = vadd.f32 %v1589, %v1647
        %1649 = vdwg.mxu0
        %1650 = vmatpush.bf16.msra.mxu0 0
        %1651 = vmatpush.bf16.msra.mxu0 0
        %1652 = vmatpush.bf16.msra.mxu0 0
        %1653 = vmatpush.bf16.msra.mxu0 0
        %1654 = vmatpush.bf16.msra.mxu0 %v1624
        %1655 = vmatpush.bf16.msra.mxu0 %v1622
        %1656 = vmatpush.bf16.msra.mxu0 %v1620
        %1657 = vmatpush.bf16.msra.mxu0 %v1618
        %1658 = vmatmul.bf16.gmra.mxu0 %v1634
        %v1659 = vpop.f32.mrf.mxu0
        %v1660 = vadd.f32 %v1590, %v1659
        %v1661 = vpop.f32.mrf.mxu0
        %v1662 = vadd.f32 %v1590, %v1661
        %1663 = vdwg.mxu0
        %v1664 = vmul.f32 %v1646, 0.5
        %v1665 = vmul.f32 %v1660, 0.5
        %v1666 = vmul.f32 %v1648, 0.5
        %v1667 = vmul.f32 %v1662, 0.5
        %v1668 = vmul.f32 %v1646, 0.70710677
        %v1669 = vmul.f32 %v1660, 0.70710677
        %v1670 = vmul.f32 %v1648, 0.70710677
        %v1671 = vmul.f32 %v1662, 0.70710677
        %v1672 = vmul.f32 %v1668, %v1668
        %v1673 = vmin.f32 16.0, %v1672
        %v1674 = vmul.f32 %v1673, 2.1237322e-06
        %v1675 = vadd.f32 %v1674, 0.00028619796
        %v1676 = vmul.f32 %v1673, %v1675
        %v1677 = vadd.f32 %v1676, 0.0036580483
        %v1678 = vmul.f32 %v1673, %v1677
        %v1679 = vadd.f32 %v1678, 0.05243302
        %v1680 = vmul.f32 %v1673, %v1679
        %v1681 = vadd.f32 %v1680, 0.18741608
        %v1682 = vmul.f32 %v1673, %v1681
        %v1683 = vadd.f32 %v1682, 1.1283791
        %v1684 = vmul.f32 %v1668, %v1683
        %v1685 = vmul.f32 %v1673, 3.8918573e-05
        %v1686 = vadd.f32 %v1685, 0.001143296
        %v1687 = vmul.f32 %v1673, %v1686
        %v1688 = vadd.f32 %v1687, 0.014752088
        %v1689 = vmul.f32 %v1673, %v1688
        %v1690 = vadd.f32 %v1689, 0.112945676
        %v1691 = vmul.f32 %v1673, %v1690
        %v1692 = vadd.f32 %v1691, 0.4994258
        %v1693 = vmul.f32 %v1673, %v1692
        %v1694 = vadd.f32 %v1693, 1.0
        %v1695 = vrcp.pop %v1694
        %v1696 = vmul.f32 %v1694, %v1695
        %v1697 = vsub.f32 1.0, %v1696
        %v1698 = vmul.f32 %v1695, %v1697
        %v1699 = vadd.f32 %v1695, %v1698
        %vm1700 = vweird.f32 %v1694
        %vm1701 = vweird.f32 %v1695
        %vm1702 = vmor %vm1700, %vm1701
        %v1703 = vsel %vm1702, %v1695, %v1699
        %v1704 = vand.u32 2147483647, %v1694
        %vm1705 = vcmp.eq.f32.partialorder %v1704, 8.507059e+37
        %v1706 = vand.u32 %v1694, 2147483648
        %v1707 = vor.u32 1.1754944e-38, %v1706
        %v1708 = vsel %vm1705, %v1707, %v1703
        %v1709 = vmul.f32 %v1684, %v1708
        %v1710 = vmin.f32 %v1709, 1.0
        %v1711 = vmax.f32 %v1710, -1.0
        %v1712 = vmul.f32 %v1669, %v1669
        %v1713 = vmin.f32 16.0, %v1712
        %v1714 = vmul.f32 %v1713, 2.1237322e-06
        %v1715 = vadd.f32 %v1714, 0.00028619796
        %v1716 = vmul.f32 %v1713, %v1715
        %v1717 = vadd.f32 %v1716, 0.0036580483
        %v1718 = vmul.f32 %v1713, %v1717
        %v1719 = vadd.f32 %v1718, 0.05243302
        %v1720 = vmul.f32 %v1713, %v1719
        %v1721 = vadd.f32 %v1720, 0.18741608
        %v1722 = vmul.f32 %v1713, %v1721
        %v1723 = vadd.f32 %v1722, 1.1283791
        %v1724 = vmul.f32 %v1669, %v1723
        %v1725 = vmul.f32 %v1713, 3.8918573e-05
        %v1726 = vadd.f32 %v1725, 0.001143296
        %v1727 = vmul.f32 %v1713, %v1726
        %v1728 = vadd.f32 %v1727, 0.014752088
        %v1729 = vmul.f32 %v1713, %v1728
        %v1730 = vadd.f32 %v1729, 0.112945676
        %v1731 = vmul.f32 %v1713, %v1730
        %v1732 = vadd.f32 %v1731, 0.4994258
        %v1733 = vmul.f32 %v1713, %v1732
        %v1734 = vadd.f32 %v1733, 1.0
        %v1735 = vrcp.pop %v1734
        %v1736 = vmul.f32 %v1734, %v1735
        %v1737 = vsub.f32 1.0, %v1736
        %v1738 = vmul.f32 %v1735, %v1737
        %v1739 = vadd.f32 %v1735, %v1738
        %vm1740 = vweird.f32 %v1734
        %vm1741 = vweird.f32 %v1735
        %vm1742 = vmor %vm1740, %vm1741
        %v1743 = vsel %vm1742, %v1735, %v1739
        %v1744 = vand.u32 2147483647, %v1734
        %vm1745 = vcmp.eq.f32.partialorder %v1744, 8.507059e+37
        %v1746 = vand.u32 %v1734, 2147483648
        %v1747 = vor.u32 1.1754944e-38, %v1746
        %v1748 = vsel %vm1745, %v1747, %v1743
        %v1749 = vmul.f32 %v1724, %v1748
        %v1750 = vmin.f32 %v1749, 1.0
        %v1751 = vmax.f32 %v1750, -1.0
        %v1752 = vmul.f32 %v1670, %v1670
        %v1753 = vmin.f32 16.0, %v1752
        %v1754 = vmul.f32 %v1753, 2.1237322e-06
        %v1755 = vadd.f32 %v1754, 0.00028619796
        %v1756 = vmul.f32 %v1753, %v1755
        %v1757 = vadd.f32 %v1756, 0.0036580483
        %v1758 = vmul.f32 %v1753, %v1757
        %v1759 = vadd.f32 %v1758, 0.05243302
        %v1760 = vmul.f32 %v1753, %v1759
        %v1761 = vadd.f32 %v1760, 0.18741608
        %v1762 = vmul.f32 %v1753, %v1761
        %v1763 = vadd.f32 %v1762, 1.1283791
        %v1764 = vmul.f32 %v1670, %v1763
        %v1765 = vmul.f32 %v1753, 3.8918573e-05
        %v1766 = vadd.f32 %v1765, 0.001143296
        %v1767 = vmul.f32 %v1753, %v1766
        %v1768 = vadd.f32 %v1767, 0.014752088
        %v1769 = vmul.f32 %v1753, %v1768
        %v1770 = vadd.f32 %v1769, 0.112945676
        %v1771 = vmul.f32 %v1753, %v1770
        %v1772 = vadd.f32 %v1771, 0.4994258
        %v1773 = vmul.f32 %v1753, %v1772
        %v1774 = vadd.f32 %v1773, 1.0
        %v1775 = vrcp.pop %v1774
        %v1776 = vmul.f32 %v1774, %v1775
        %v1777 = vsub.f32 1.0, %v1776
        %v1778 = vmul.f32 %v1775, %v1777
        %v1779 = vadd.f32 %v1775, %v1778
        %vm1780 = vweird.f32 %v1774
        %vm1781 = vweird.f32 %v1775
        %vm1782 = vmor %vm1780, %vm1781
        %v1783 = vsel %vm1782, %v1775, %v1779
        %v1784 = vand.u32 2147483647, %v1774
        %vm1785 = vcmp.eq.f32.partialorder %v1784, 8.507059e+37
        %v1786 = vand.u32 %v1774, 2147483648
        %v1787 = vor.u32 1.1754944e-38, %v1786
        %v1788 = vsel %vm1785, %v1787, %v1783
        %v1789 = vmul.f32 %v1764, %v1788
        %v1790 = vmin.f32 %v1789, 1.0
        %v1791 = vmax.f32 %v1790, -1.0
        %v1792 = vmul.f32 %v1671, %v1671
        %v1793 = vmin.f32 16.0, %v1792
        %v1794 = vmul.f32 %v1793, 2.1237322e-06
        %v1795 = vadd.f32 %v1794, 0.00028619796
        %v1796 = vmul.f32 %v1793, %v1795
        %v1797 = vadd.f32 %v1796, 0.0036580483
        %v1798 = vmul.f32 %v1793, %v1797
        %v1799 = vadd.f32 %v1798, 0.05243302
        %v1800 = vmul.f32 %v1793, %v1799
        %v1801 = vadd.f32 %v1800, 0.18741608
        %v1802 = vmul.f32 %v1793, %v1801
        %v1803 = vadd.f32 %v1802, 1.1283791
        %v1804 = vmul.f32 %v1671, %v1803
        %v1805 = vmul.f32 %v1793, 3.8918573e-05
        %v1806 = vadd.f32 %v1805, 0.001143296
        %v1807 = vmul.f32 %v1793, %v1806
        %v1808 = vadd.f32 %v1807, 0.014752088
        %v1809 = vmul.f32 %v1793, %v1808
        %v1810 = vadd.f32 %v1809, 0.112945676
        %v1811 = vmul.f32 %v1793, %v1810
        %v1812 = vadd.f32 %v1811, 0.4994258
        %v1813 = vmul.f32 %v1793, %v1812
        %v1814 = vadd.f32 %v1813, 1.0
        %v1815 = vrcp.pop %v1814
        %v1816 = vmul.f32 %v1814, %v1815
        %v1817 = vsub.f32 1.0, %v1816
        %v1818 = vmul.f32 %v1815, %v1817
        %v1819 = vadd.f32 %v1815, %v1818
        %vm1820 = vweird.f32 %v1814
        %vm1821 = vweird.f32 %v1815
        %vm1822 = vmor %vm1820, %vm1821
        %v1823 = vsel %vm1822, %v1815, %v1819
        %v1824 = vand.u32 2147483647, %v1814
        %vm1825 = vcmp.eq.f32.partialorder %v1824, 8.507059e+37
        %v1826 = vand.u32 %v1814, 2147483648
        %v1827 = vor.u32 1.1754944e-38, %v1826
        %v1828 = vsel %vm1825, %v1827, %v1823
        %v1829 = vmul.f32 %v1804, %v1828
        %v1830 = vmin.f32 %v1829, 1.0
        %v1831 = vmax.f32 %v1830, -1.0
        %v1832 = vadd.f32 %v1711, 1.0
        %v1833 = vadd.f32 %v1751, 1.0
        %v1834 = vadd.f32 %v1791, 1.0
        %v1835 = vadd.f32 %v1831, 1.0
        %v1836 = vmul.f32 %v1664, %v1832
        %v1837 = vmul.f32 %v1665, %v1833
        %v1838 = vmul.f32 %v1666, %v1834
        %v1839 = vmul.f32 %v1667, %v1835
        %v1840 = vpack.c.bf16 %v1838, %v1836
        %v1841 = vpack.c.bf16 %v1839, %v1837
        %v1842 = vld [vmem:[%s15] sm:$0xf]
        %v1843 = vld [vmem:[%s15 + $0x4] sm:$0xf]
        %v1844 = vld [vmem:[%s15 + $0x8] sm:$0xf]
        %v1845 = vld [vmem:[%s15 + $0xc] sm:$0xf]
        %v1846 = vld [vmem:[%s15 + $0x10] sm:$0xf]
        %v1847 = vld [vmem:[%s15 + $0x14] sm:$0xf]
        %v1848 = vld [vmem:[%s15 + $0x18] sm:$0xf]
        %v1849 = vld [vmem:[%s15 + $0x1c] sm:$0xf]
        %v1850 = vld [vmem:[%s15 + $0x20] sm:$0xf]
        %v1851 = vld [vmem:[%s15 + $0x24] sm:$0xf]
        %v1852 = vld [vmem:[%s15 + $0x28] sm:$0xf]
        %v1853 = vld [vmem:[%s15 + $0x2c] sm:$0xf]
        %v1854 = vld [vmem:[%s15 + $0x30] sm:$0xf]
        %v1855 = vld [vmem:[%s15 + $0x34] sm:$0xf]
        %v1856 = vld [vmem:[%s15 + $0x38] sm:$0xf]
        %v1857 = vld [vmem:[%s15 + $0x3c] sm:$0xf]
        %v1858 = vld [vmem:[%s15 + $0x40] sm:$0xf]
        %v1859 = vld [vmem:[%s15 + $0x44] sm:$0xf]
        %v1860 = vld [vmem:[%s15 + $0x48] sm:$0xf]
        %v1861 = vld [vmem:[%s15 + $0x4c] sm:$0xf]
        %v1862 = vld [vmem:[%s15 + $0x50] sm:$0xf]
        %v1863 = vld [vmem:[%s15 + $0x54] sm:$0xf]
        %v1864 = vld [vmem:[%s15 + $0x58] sm:$0xf]
        %v1865 = vld [vmem:[%s15 + $0x5c] sm:$0xf]
        %v1866 = vld [vmem:[%s15 + $0x60] sm:$0xf]
        %v1867 = vld [vmem:[%s15 + $0x64] sm:$0xf]
        %v1868 = vld [vmem:[%s15 + $0x68] sm:$0xf]
        %v1869 = vld [vmem:[%s15 + $0x6c] sm:$0xf]
        %v1870 = vld [vmem:[%s15 + $0x70] sm:$0xf]
        %v1871 = vld [vmem:[%s15 + $0x74] sm:$0xf]
        %v1872 = vld [vmem:[%s15 + $0x78] sm:$0xf]
        %v1873 = vld [vmem:[%s15 + $0x7c] sm:$0xf]
        %v1874 = vld [vmem:[%s16] sm:$0x1]
        %v1876 = vperm.slane %v1874, 0
        %v1910 = vunpack.c.l.b16 %v1842
        %v1911 = vunpack.c.l.b16 %v1843
        %v1912 = vunpack.c.l.b16 %v1844
        %v1913 = vunpack.c.l.b16 %v1845
        %v1914 = vunpack.c.l.b16 %v1846
        %v1915 = vunpack.c.l.b16 %v1847
        %v1916 = vunpack.c.l.b16 %v1848
        %v1917 = vunpack.c.l.b16 %v1849
        %v1918 = vunpack.c.l.b16 %v1850
        %v1919 = vunpack.c.l.b16 %v1851
        %v1920 = vunpack.c.l.b16 %v1852
        %v1921 = vunpack.c.l.b16 %v1853
        %v1922 = vunpack.c.l.b16 %v1854
        %v1923 = vunpack.c.l.b16 %v1855
        %v1924 = vunpack.c.l.b16 %v1856
        %v1925 = vunpack.c.l.b16 %v1857
        %v1926 = vunpack.c.l.b16 %v1858
        %v1927 = vunpack.c.l.b16 %v1859
        %v1928 = vunpack.c.l.b16 %v1860
        %v1929 = vunpack.c.l.b16 %v1861
        %v1930 = vunpack.c.l.b16 %v1862
        %v1931 = vunpack.c.l.b16 %v1863
        %v1932 = vunpack.c.l.b16 %v1864
        %v1933 = vunpack.c.l.b16 %v1865
        %v1934 = vunpack.c.l.b16 %v1866
        %v1935 = vunpack.c.l.b16 %v1867
        %v1936 = vunpack.c.l.b16 %v1868
        %v1937 = vunpack.c.l.b16 %v1869
        %v1938 = vunpack.c.l.b16 %v1870
        %v1939 = vunpack.c.l.b16 %v1871
        %v1940 = vunpack.c.l.b16 %v1872
        %v1941 = vunpack.c.l.b16 %v1873
        %v1942 = vpack.c.b16 %v1911, %v1910
        %v1943 = vpack.c.b16 %v1913, %v1912
        %v1944 = vpack.c.b16 %v1915, %v1914
        %v1945 = vpack.c.b16 %v1917, %v1916
        %v1946 = vpack.c.b16 %v1919, %v1918
        %v1947 = vpack.c.b16 %v1921, %v1920
        %v1948 = vpack.c.b16 %v1923, %v1922
        %v1949 = vpack.c.b16 %v1925, %v1924
        %v1950 = vpack.c.b16 %v1927, %v1926
        %v1951 = vpack.c.b16 %v1929, %v1928
        %v1952 = vpack.c.b16 %v1931, %v1930
        %v1953 = vpack.c.b16 %v1933, %v1932
        %v1954 = vpack.c.b16 %v1935, %v1934
        %v1955 = vpack.c.b16 %v1937, %v1936
        %v1956 = vpack.c.b16 %v1939, %v1938
        %v1957 = vpack.c.b16 %v1941, %v1940
        %1974 = vmatpush.bf16.msra.mxu0 %v1949
        %1975 = vmatpush.bf16.msra.mxu0 %v1948
        %1976 = vmatpush.bf16.msra.mxu0 %v1947
        %1977 = vmatpush.bf16.msra.mxu0 %v1946
        %1978 = vmatpush.bf16.msra.mxu0 %v1945
        %1979 = vmatpush.bf16.msra.mxu0 %v1944
        %1980 = vmatpush.bf16.msra.mxu0 %v1943
        %1981 = vmatpush.bf16.msra.mxu0 %v1942
        %1982 = vmatmul.bf16.gmra.mxu0 %v1840
        %v1983 = vpop.f32.mrf.mxu0
        %v1984 = vadd.f32 %v1876, %v1983
        %v1985 = vpop.f32.mrf.mxu0
        %v1986 = vadd.f32 %v1876, %v1985
        %1987 = vdwg.mxu0
        %1988 = vmatpush.bf16.msra.mxu0 %v1957
        %1989 = vmatpush.bf16.msra.mxu0 %v1956
        %1990 = vmatpush.bf16.msra.mxu0 %v1955
        %1991 = vmatpush.bf16.msra.mxu0 %v1954
        %1992 = vmatpush.bf16.msra.mxu0 %v1953
        %1993 = vmatpush.bf16.msra.mxu0 %v1952
        %1994 = vmatpush.bf16.msra.mxu0 %v1951
        %1995 = vmatpush.bf16.msra.mxu0 %v1950
        %1996 = vmatmul.bf16.gmra.mxu0 %v1841
        %v1997 = vpop.f32.mrf.mxu0
        %v1998 = vadd.f32 %v1984, %v1997
        %v1999 = vpop.f32.mrf.mxu0
        %v2000 = vadd.f32 %v1986, %v1999
        %2001 = vdwg.mxu0
        %v2002 = vadd.f32 %v1513, %v1998
        %v2003 = vadd.f32 %v1514, %v2000
        %2004 = vst.msk [vmem:[%s632] sm:$0xff] %vm1059, %v2002
        %2005 = vst.msk [vmem:[%s632 + $0x8] sm:$0xff] %vm1059, %v2003
        %s2006 = sand.u32 %s418, 1
        %s2007 = scalar_lea.sflag [#allocation7], %s2006
        %s2008 = sand.u32 %s418, 1
        %s2009 = smul.addr %s2008, 16
        %s2010 = scalar_lea.vmem [#allocation14], %s2009
        // Predicated region
        $region113: #{tpu_custom_call.1} parent=87 // pred_check
          %p2011 = pneg %p428
        $region114: #{tpu_custom_call.1} parent=87 // pred_check_branch
          %2013 = sbr.rel (%p2011) target = $region116
        $region115: #{tpu_custom_call.1} parent=87 // pred_region
          %s2014 = smul.u32 2, %s39
          %2016 = vsyncadd %s2007, 0
          %s2017 = smul.addr %s38, 4
          %s2018 = sadd.s32 %s2014, %s2017
          %s2019 = smul.addr %s2018, 8
          %s2020 = scalar_lea.hbm %s17, %s2019
          %s2021 = sshll.u32 %s2010, 4
          %s2022 = int_to_ptr.vmem [resolvable:$true] %s2021
          %s2023 = sshll.u32 %s2020, 4
          %s2024 = int_to_ptr.hbm [resolvable:$true] %s2023
          %2029 = dma.vmem_to_hbm [thread:$0]  %s2022, 256, %s2024, %s2007, 128, 128, 8
        $region116: #{tpu_custom_call.1} parent=87 // pred_fallthru
          _
      $region88: #{tpu_custom_call.1} parent=5 // pred_fallthru
        _
      %p2030 = scmp.le.s32.totalorder 2, %s29
      // Predicated region
      $region117: #{tpu_custom_call.1} parent=5 // pred_check
        %p2031 = pneg %p2030
      $region118: #{tpu_custom_call.1} parent=5 // pred_check_branch
        %2033 = sbr.rel (%p2031) target = $region120
      $region119: #{tpu_custom_call.1} parent=5 // pred_region
        %s2034 = ssub.s32 %s29, 2
        // Predicated region
        $region121: #{tpu_custom_call.1} parent=119 // pred_check
          %p2035 = pneg %p434
        $region122: #{tpu_custom_call.1} parent=119 // pred_check_branch
          %2037 = sbr.rel (%p2035) target = $region124
        $region123: #{tpu_custom_call.1} parent=119 // pred_region
          %s2038 = sand.u32 %s419, 1
          %s2039 = scalar_lea.sflag [#allocation7], %s2038
          %s2040 = sand.u32 %s419, 1
          %s2041 = smul.addr %s2040, 16
          %s2042 = scalar_lea.vmem [#allocation14], %s2041
          %2044 = dma.done %s2039, 256
        $region124: #{tpu_custom_call.1} parent=119 // pred_fallthru
          _
      $region120: #{tpu_custom_call.1} parent=5 // pred_fallthru
        _
    $region6: #{tpu_custom_call.1} parent=1 // loop_footer
      %s33 = sadd.s32 1, %s29
    $region7: #{tpu_custom_call.1} parent=1 // loop_footer_branch
      %28 = sbr.rel target = $region3
    $region8: #{tpu_custom_call.1} parent=1 // loop_exit
      _
    %2045 = vsyncpa [#allocation6], 1
    %s2046 = scalar_lea.sflag [#allocation6], 1
    %2047 = vsyncpa %s2046, 1
    %2048 = vsyncpa [#allocation9], 1
    %2049 = vsyncpa [#allocation12], 1
    %2050 = vsyncpa [#allocation7], 1
    %s2051 = scalar_lea.sflag [#allocation7], 1
    %2052 = vsyncpa %s2051, 1

</llo_original>
